<compile_context>
chip_gen: v5e
topology: v5e:2x2
jax: 0.10.0
libtpu: 0.0.40
codegen_flags: <defaults>
</compile_context>

<pallas_src>
import functools
import math

import jax
import jax.numpy as jnp
from jax import lax
from jax.experimental import pallas as pl
from jax.experimental.pallas import tpu as pltpu

EPS = 1e-5
LANE = 128


def _round_up(x, m):
    return ((x + m - 1) // m) * m


def _conv_stats_kernel(x0_ref, x1_ref, x2_ref, w_ref, b_ref, y_ref, stats_ref,
                       *, n, w_out, cin_p, cout_p):
    """Pass 1: conv (implicit im2col, 9 MXU matmuls) + bias + per-tile BN stats.

    x*_ref : (N, W+2, Cin_p) bf16  -- padded input rows h, h+1, h+2
    w_ref  : (9, Cin_p, Cout_p) bf16
    b_ref  : (1, Cout_p) f32
    y_ref  : (N*W, Cout_p) f32     -- conv + bias for this output row
    stats_ref : (2, Cout_p) f32    -- [sum, sum of squares] over this tile
    """
    nw = n * w_out
    acc = jnp.zeros((nw, cout_p), jnp.float32)
    rows = (x0_ref, x1_ref, x2_ref)
    for kh in range(3):
        xrow = rows[kh][...]                                   # (N, W+2, Cin_p)
        for kw in range(3):
            win = xrow[:, kw:kw + w_out, :].reshape(nw, cin_p)  # static slice
            acc = acc + jnp.dot(win, w_ref[kh * 3 + kw],
                                preferred_element_type=jnp.float32)
    y = acc + b_ref[...]
    y_ref[...] = y
    stats_ref[0:1, :] = jnp.sum(y, axis=0, keepdims=True)
    stats_ref[1:2, :] = jnp.sum(y * y, axis=0, keepdims=True)


def _bn_relu_kernel(y_ref, scale_ref, shift_ref, o_ref):
    """Pass 2: y * scale + shift -> ReLU (scale/shift fold mean/var/gamma/beta)."""
    o_ref[...] = jnp.maximum(y_ref[...] * scale_ref[...] + shift_ref[...], 0.0)


@jax.jit
def encode_conv_forward(x_nchw, weight, bias, gamma, beta):
    """x_nchw: (N, Cin, H, W); weight: (Cout, Cin, 3, 3); bias/gamma/beta: (Cout,)."""
    N, Cin, H, W = x_nchw.shape
    Cout = weight.shape[0]
    Cin_p = _round_up(Cin, LANE)
    Cout_p = _round_up(Cout, LANE)
    NW = N * W
    M = N * H * W

    # ---- glue: layout + lane padding + bf16 cast of MXU operands ----
    x = jnp.transpose(x_nchw, (0, 2, 3, 1)).astype(jnp.float32)          # NHWC
    xp = jnp.pad(x, ((0, 0), (1, 1), (1, 1), (0, Cin_p - Cin))).astype(jnp.bfloat16)

    wm = jnp.transpose(weight.astype(jnp.float32), (2, 3, 1, 0))          # (3,3,Cin,Cout)
    wm = jnp.pad(wm, ((0, 0), (0, 0), (0, Cin_p - Cin), (0, Cout_p - Cout)))
    wm = wm.reshape(9, Cin_p, Cout_p).astype(jnp.bfloat16)

    b_p = jnp.pad(bias.astype(jnp.float32), (0, Cout_p - Cout)).reshape(1, Cout_p)
    g_p = jnp.pad(gamma.astype(jnp.float32), (0, Cout_p - Cout)).reshape(1, Cout_p)
    bt_p = jnp.pad(beta.astype(jnp.float32), (0, Cout_p - Cout)).reshape(1, Cout_p)

    vmem_limit = 32 * 1024 * 1024  # fits v5e/v6e/v7x scoped VMEM comfortably

    # ---- pass 1: conv + bias + per-tile stats, grid over output rows ----
    # Each grid step h handles all N images' output row h (M-tile of N*W pixels).
    # For very large N*W, additionally split N or W into the grid.
    in_specs = [
        pl.BlockSpec((N, None, W + 2, Cin_p), lambda h: (0, h, 0, 0)),      # kh = 0
        pl.BlockSpec((N, None, W + 2, Cin_p), lambda h: (0, h + 1, 0, 0)),  # kh = 1
        pl.BlockSpec((N, None, W + 2, Cin_p), lambda h: (0, h + 2, 0, 0)),  # kh = 2
        pl.BlockSpec((9, Cin_p, Cout_p), lambda h: (0, 0, 0)),              # weights (resident)
        pl.BlockSpec((1, Cout_p), lambda h: (0, 0)),                        # bias (resident)
    ]
    out_specs = [
        pl.BlockSpec((None, NW, Cout_p), lambda h: (h, 0, 0)),              # conv activation
        pl.BlockSpec((None, 2, Cout_p), lambda h: (h, 0, 0)),               # per-tile stats
    ]
    flops1 = 2 * M * 9 * Cin_p * Cout_p
    bytes1 = (3 * xp.size * 2 + wm.size * 2 + b_p.size * 4
              + H * NW * Cout_p * 4 + H * 2 * Cout_p * 4)

    y_flat, stats = pl.pallas_call(
        functools.partial(_conv_stats_kernel, n=N, w_out=W, cin_p=Cin_p, cout_p=Cout_p),
        out_shape=(jax.ShapeDtypeStruct((H, NW, Cout_p), jnp.float32),
                   jax.ShapeDtypeStruct((H, 2, Cout_p), jnp.float32)),
        grid_spec=pltpu.PrefetchScalarGridSpec(
            num_scalar_prefetch=0, grid=(H,),
            in_specs=in_specs, out_specs=out_specs),
        compiler_params=pltpu.CompilerParams(
            dimension_semantics=("parallel",),
            vmem_limit_bytes=vmem_limit),
        cost_estimate=pl.CostEstimate(flops=flops1, transcendentals=0,
                                      bytes_accessed=bytes1),
    )(xp, xp, xp, wm, b_p)

    # ---- glue: tiny cross-tile reduction -> BN scale/shift (all f32) ----
    s = jnp.sum(stats[:, 0, :], axis=0)                  # (Cout_p,)
    ss = jnp.sum(stats[:, 1, :], axis=0)                 # (Cout_p,)
    mean = s / M
    var = jnp.maximum(ss / M - mean * mean, 0.0)         # biased var, train-mode BN
    inv = lax.rsqrt(var + EPS)
    scale = (g_p[0] * inv).reshape(1, Cout_p)
    shift = (bt_p[0] - mean * g_p[0] * inv).reshape(1, Cout_p)

    # ---- pass 2: normalize + ReLU, lane-dense (Cout_p = 128k) stores ----
    out_flat = pl.pallas_call(
        _bn_relu_kernel,
        out_shape=jax.ShapeDtypeStruct((H, NW, Cout_p), jnp.float32),
        grid_spec=pltpu.PrefetchScalarGridSpec(
            num_scalar_prefetch=0, grid=(H,),
            in_specs=[pl.BlockSpec((None, NW, Cout_p), lambda h: (h, 0, 0)),
                      pl.BlockSpec((1, Cout_p), lambda h: (0, 0)),
                      pl.BlockSpec((1, Cout_p), lambda h: (0, 0))],
            out_specs=pl.BlockSpec((None, NW, Cout_p), lambda h: (h, 0, 0))),
        compiler_params=pltpu.CompilerParams(
            dimension_semantics=("parallel",),
            vmem_limit_bytes=vmem_limit),
        cost_estimate=pl.CostEstimate(flops=3 * M * Cout_p, transcendentals=0,
                                      bytes_accessed=2 * H * NW * Cout_p * 4),
    )(y_flat, scale, shift)

    # (H, N*W, Cout_p) -> (H, N, W, Cout) -> NCHW
    out = out_flat.reshape(H, N, W, Cout_p)[:, :, :, :Cout]
    return jnp.transpose(out, (1, 3, 0, 2))


def _reference(x_nchw, weight, bias, gamma, beta):
    """Plain-JAX reference matching PyTorch train-mode Conv->BN->ReLU.

    Inputs are rounded to bf16 (like the kernel's MXU operands); the conv itself
    is computed at highest precision, BN in f32 — mirroring the kernel's
    bf16-operand / f32-accumulation numerics.
    """
    xr = x_nchw.astype(jnp.bfloat16).astype(jnp.float32)
    wr = weight.astype(jnp.bfloat16).astype(jnp.float32)
    y = lax.conv_general_dilated(
        xr, wr, window_strides=(1, 1), padding=((1, 1), (1, 1)),
        dimension_numbers=("NCHW", "OIHW", "NCHW"),
        precision=lax.Precision.HIGHEST)
    y = y + bias.reshape(1, -1, 1, 1)
    mean = jnp.mean(y, axis=(0, 2, 3), keepdims=True)
    var = jnp.mean((y - mean) ** 2, axis=(0, 2, 3), keepdims=True)
    y = (y - mean) * lax.rsqrt(var + EPS)
    y = y * gamma.reshape(1, -1, 1, 1) + beta.reshape(1, -1, 1, 1)
    return jnp.maximum(y, 0.0)


if __name__ == "__main__":
    key = jax.random.PRNGKey(0)
    k_x, k_w, k_b = jax.random.split(key, 3)

    N, Cin, H, W = 2, 4, 16, 16
    Cout, ksz = 8, 3

    x = jax.random.normal(k_x, (N, Cin, H, W), dtype=jnp.float32)

    # Deterministic PyTorch-like init (BN gamma=1, beta=0).
    fan_in = Cin * ksz * ksz
    w_scale = 1.0 / math.sqrt(fan_in)
    weight = jax.random.uniform(k_w, (Cout, Cin, ksz, ksz), jnp.float32,
                                minval=-w_scale, maxval=w_scale)
    bias = jax.random.uniform(k_b, (Cout,), jnp.float32,
                              minval=-w_scale, maxval=w_scale)
    gamma = jnp.ones((Cout,), jnp.float32)
    beta = jnp.zeros((Cout,), jnp.float32)

    out = encode_conv_forward(x, weight, bias, gamma, beta)
    out = jax.block_until_ready(out)

    ref = _reference(x, weight, bias, gamma, beta)
    assert out.shape == (N, Cout, H, W), out.shape
    err = float(jnp.max(jnp.abs(out - ref)))
    assert err < 5e-3, err

    # TODO(synk): BatchNorm running_mean/running_var momentum updates (a
    # training-time buffer side effect, not part of the forward output) are
    # not emitted; mean/var could be returned from the glue step if needed.
    print("KERNEL_OK")
</pallas_src>

<mosaic_0001>
module attributes {stable_mosaic.version = 11 : i64} {
  func.func @_conv_stats_kernel(%arg0: i32, %arg1: memref<2x1x18x128xbf16, #tpu.memory_space<vmem>>, %arg2: memref<2x1x18x128xbf16, #tpu.memory_space<vmem>>, %arg3: memref<2x1x18x128xbf16, #tpu.memory_space<vmem>>, %arg4: memref<9x128x128xbf16, #tpu.memory_space<vmem>>, %arg5: memref<1x128xf32, #tpu.memory_space<vmem>>, %arg6: memref<1x32x128xf32, #tpu.memory_space<vmem>>, %arg7: memref<1x2x128xf32, #tpu.memory_space<vmem>>) attributes {dimension_semantics = [#tpu.dimension_semantics<parallel>], iteration_bounds = array<i64: 16>, scalar_prefetch = 0 : i64, scratch_operands = 0 : i64, tpu.core_type = #tpu.core_type<tc>, window_params = [{transform_indices = @transform_0, window_bounds = array<i64: 2, 1, 18, 128>}, {transform_indices = @transform_1, window_bounds = array<i64: 2, 1, 18, 128>}, {transform_indices = @transform_2, window_bounds = array<i64: 2, 1, 18, 128>}, {pipeline_mode = #tpu.pipeline_mode<synchronous>, transform_indices = @transform_3, window_bounds = array<i64: 9, 128, 128>}, {pipeline_mode = #tpu.pipeline_mode<synchronous>, transform_indices = @transform_4, window_bounds = array<i64: 1, 128>}, {transform_indices = @transform_5, window_bounds = array<i64: 1, 32, 128>}, {transform_indices = @transform_6, window_bounds = array<i64: 1, 2, 128>}]} {
    %cst = arith.constant 0.000000e+00 : f32
    %0 = vector.broadcast %cst : f32 to vector<32x128xf32>
    %c0 = arith.constant 0 : index
    %c0_0 = arith.constant 0 : index
    %c0_1 = arith.constant 0 : index
    %c0_2 = arith.constant 0 : index
    %1 = vector.load %arg1[%c0, %c0_0, %c0_1, %c0_2] : memref<2x1x18x128xbf16, #tpu.memory_space<vmem>>, vector<2x1x18x128xbf16>
    %2 = vector.shape_cast %1 : vector<2x1x18x128xbf16> to vector<2x18x128xbf16>
    %3 = vector.extract_strided_slice %2 {offsets = [0, 0, 0], sizes = [2, 16, 128], strides = [1, 1, 1]} : vector<2x18x128xbf16> to vector<2x16x128xbf16>
    %4 = vector.shape_cast %3 : vector<2x16x128xbf16> to vector<32x128xbf16>
    %c0_3 = arith.constant 0 : index
    %c0_4 = arith.constant 0 : index
    %c0_5 = arith.constant 0 : index
    %5 = vector.load %arg4[%c0_3, %c0_4, %c0_5] : memref<9x128x128xbf16, #tpu.memory_space<vmem>>, vector<1x128x128xbf16>
    %6 = vector.shape_cast %5 : vector<1x128x128xbf16> to vector<128x128xbf16>
    %cst_6 = arith.constant dense<0.000000e+00> : vector<32x128xf32>
    %7 = tpu.matmul %4, %6, %cst_6 {dimension_numbers = #tpu.dot_dimension_numbers<[1], [0], [0], [1], [0, 0, 1, 1], [], []>} : vector<32x128xbf16>, vector<128x128xbf16>, vector<32x128xf32> -> vector<32x128xf32>
    %8 = arith.addf %0, %7 : vector<32x128xf32>
    %9 = vector.extract_strided_slice %2 {offsets = [0, 1, 0], sizes = [2, 16, 128], strides = [1, 1, 1]} : vector<2x18x128xbf16> to vector<2x16x128xbf16>
    %10 = vector.shape_cast %9 : vector<2x16x128xbf16> to vector<32x128xbf16>
    %c1 = arith.constant 1 : index
    %c0_7 = arith.constant 0 : index
    %c0_8 = arith.constant 0 : index
    %11 = vector.load %arg4[%c1, %c0_7, %c0_8] : memref<9x128x128xbf16, #tpu.memory_space<vmem>>, vector<1x128x128xbf16>
    %12 = vector.shape_cast %11 : vector<1x128x128xbf16> to vector<128x128xbf16>
    %cst_9 = arith.constant dense<0.000000e+00> : vector<32x128xf32>
    %13 = tpu.matmul %10, %12, %cst_9 {dimension_numbers = #tpu.dot_dimension_numbers<[1], [0], [0], [1], [0, 0, 1, 1], [], []>} : vector<32x128xbf16>, vector<128x128xbf16>, vector<32x128xf32> -> vector<32x128xf32>
    %14 = arith.addf %8, %13 : vector<32x128xf32>
    %15 = vector.extract_strided_slice %2 {offsets = [0, 2, 0], sizes = [2, 16, 128], strides = [1, 1, 1]} : vector<2x18x128xbf16> to vector<2x16x128xbf16>
    %16 = vector.shape_cast %15 : vector<2x16x128xbf16> to vector<32x128xbf16>
    %c2 = arith.constant 2 : index
    %c0_10 = arith.constant 0 : index
    %c0_11 = arith.constant 0 : index
    %17 = vector.load %arg4[%c2, %c0_10, %c0_11] : memref<9x128x128xbf16, #tpu.memory_space<vmem>>, vector<1x128x128xbf16>
    %18 = vector.shape_cast %17 : vector<1x128x128xbf16> to vector<128x128xbf16>
    %cst_12 = arith.constant dense<0.000000e+00> : vector<32x128xf32>
    %19 = tpu.matmul %16, %18, %cst_12 {dimension_numbers = #tpu.dot_dimension_numbers<[1], [0], [0], [1], [0, 0, 1, 1], [], []>} : vector<32x128xbf16>, vector<128x128xbf16>, vector<32x128xf32> -> vector<32x128xf32>
    %20 = arith.addf %14, %19 : vector<32x128xf32>
    %c0_13 = arith.constant 0 : index
    %c0_14 = arith.constant 0 : index
    %c0_15 = arith.constant 0 : index
    %c0_16 = arith.constant 0 : index
    %21 = vector.load %arg2[%c0_13, %c0_14, %c0_15, %c0_16] : memref<2x1x18x128xbf16, #tpu.memory_space<vmem>>, vector<2x1x18x128xbf16>
    %22 = vector.shape_cast %21 : vector<2x1x18x128xbf16> to vector<2x18x128xbf16>
    %23 = vector.extract_strided_slice %22 {offsets = [0, 0, 0], sizes = [2, 16, 128], strides = [1, 1, 1]} : vector<2x18x128xbf16> to vector<2x16x128xbf16>
    %24 = vector.shape_cast %23 : vector<2x16x128xbf16> to vector<32x128xbf16>
    %c3 = arith.constant 3 : index
    %c0_17 = arith.constant 0 : index
    %c0_18 = arith.constant 0 : index
    %25 = vector.load %arg4[%c3, %c0_17, %c0_18] : memref<9x128x128xbf16, #tpu.memory_space<vmem>>, vector<1x128x128xbf16>
    %26 = vector.shape_cast %25 : vector<1x128x128xbf16> to vector<128x128xbf16>
    %cst_19 = arith.constant dense<0.000000e+00> : vector<32x128xf32>
    %27 = tpu.matmul %24, %26, %cst_19 {dimension_numbers = #tpu.dot_dimension_numbers<[1], [0], [0], [1], [0, 0, 1, 1], [], []>} : vector<32x128xbf16>, vector<128x128xbf16>, vector<32x128xf32> -> vector<32x128xf32>
    %28 = arith.addf %20, %27 : vector<32x128xf32>
    %29 = vector.extract_strided_slice %22 {offsets = [0, 1, 0], sizes = [2, 16, 128], strides = [1, 1, 1]} : vector<2x18x128xbf16> to vector<2x16x128xbf16>
    %30 = vector.shape_cast %29 : vector<2x16x128xbf16> to vector<32x128xbf16>
    %c4 = arith.constant 4 : index
    %c0_20 = arith.constant 0 : index
    %c0_21 = arith.constant 0 : index
    %31 = vector.load %arg4[%c4, %c0_20, %c0_21] : memref<9x128x128xbf16, #tpu.memory_space<vmem>>, vector<1x128x128xbf16>
    %32 = vector.shape_cast %31 : vector<1x128x128xbf16> to vector<128x128xbf16>
    %cst_22 = arith.constant dense<0.000000e+00> : vector<32x128xf32>
    %33 = tpu.matmul %30, %32, %cst_22 {dimension_numbers = #tpu.dot_dimension_numbers<[1], [0], [0], [1], [0, 0, 1, 1], [], []>} : vector<32x128xbf16>, vector<128x128xbf16>, vector<32x128xf32> -> vector<32x128xf32>
    %34 = arith.addf %28, %33 : vector<32x128xf32>
    %35 = vector.extract_strided_slice %22 {offsets = [0, 2, 0], sizes = [2, 16, 128], strides = [1, 1, 1]} : vector<2x18x128xbf16> to vector<2x16x128xbf16>
    %36 = vector.shape_cast %35 : vector<2x16x128xbf16> to vector<32x128xbf16>
    %c5 = arith.constant 5 : index
    %c0_23 = arith.constant 0 : index
    %c0_24 = arith.constant 0 : index
    %37 = vector.load %arg4[%c5, %c0_23, %c0_24] : memref<9x128x128xbf16, #tpu.memory_space<vmem>>, vector<1x128x128xbf16>
    %38 = vector.shape_cast %37 : vector<1x128x128xbf16> to vector<128x128xbf16>
    %cst_25 = arith.constant dense<0.000000e+00> : vector<32x128xf32>
    %39 = tpu.matmul %36, %38, %cst_25 {dimension_numbers = #tpu.dot_dimension_numbers<[1], [0], [0], [1], [0, 0, 1, 1], [], []>} : vector<32x128xbf16>, vector<128x128xbf16>, vector<32x128xf32> -> vector<32x128xf32>
    %40 = arith.addf %34, %39 : vector<32x128xf32>
    %c0_26 = arith.constant 0 : index
    %c0_27 = arith.constant 0 : index
    %c0_28 = arith.constant 0 : index
    %c0_29 = arith.constant 0 : index
    %41 = vector.load %arg3[%c0_26, %c0_27, %c0_28, %c0_29] : memref<2x1x18x128xbf16, #tpu.memory_space<vmem>>, vector<2x1x18x128xbf16>
    %42 = vector.shape_cast %41 : vector<2x1x18x128xbf16> to vector<2x18x128xbf16>
    %43 = vector.extract_strided_slice %42 {offsets = [0, 0, 0], sizes = [2, 16, 128], strides = [1, 1, 1]} : vector<2x18x128xbf16> to vector<2x16x128xbf16>
    %44 = vector.shape_cast %43 : vector<2x16x128xbf16> to vector<32x128xbf16>
    %c6 = arith.constant 6 : index
    %c0_30 = arith.constant 0 : index
    %c0_31 = arith.constant 0 : index
    %45 = vector.load %arg4[%c6, %c0_30, %c0_31] : memref<9x128x128xbf16, #tpu.memory_space<vmem>>, vector<1x128x128xbf16>
    %46 = vector.shape_cast %45 : vector<1x128x128xbf16> to vector<128x128xbf16>
    %cst_32 = arith.constant dense<0.000000e+00> : vector<32x128xf32>
    %47 = tpu.matmul %44, %46, %cst_32 {dimension_numbers = #tpu.dot_dimension_numbers<[1], [0], [0], [1], [0, 0, 1, 1], [], []>} : vector<32x128xbf16>, vector<128x128xbf16>, vector<32x128xf32> -> vector<32x128xf32>
    %48 = arith.addf %40, %47 : vector<32x128xf32>
    %49 = vector.extract_strided_slice %42 {offsets = [0, 1, 0], sizes = [2, 16, 128], strides = [1, 1, 1]} : vector<2x18x128xbf16> to vector<2x16x128xbf16>
    %50 = vector.shape_cast %49 : vector<2x16x128xbf16> to vector<32x128xbf16>
    %c7 = arith.constant 7 : index
    %c0_33 = arith.constant 0 : index
    %c0_34 = arith.constant 0 : index
    %51 = vector.load %arg4[%c7, %c0_33, %c0_34] : memref<9x128x128xbf16, #tpu.memory_space<vmem>>, vector<1x128x128xbf16>
    %52 = vector.shape_cast %51 : vector<1x128x128xbf16> to vector<128x128xbf16>
    %cst_35 = arith.constant dense<0.000000e+00> : vector<32x128xf32>
    %53 = tpu.matmul %50, %52, %cst_35 {dimension_numbers = #tpu.dot_dimension_numbers<[1], [0], [0], [1], [0, 0, 1, 1], [], []>} : vector<32x128xbf16>, vector<128x128xbf16>, vector<32x128xf32> -> vector<32x128xf32>
    %54 = arith.addf %48, %53 : vector<32x128xf32>
    %55 = vector.extract_strided_slice %42 {offsets = [0, 2, 0], sizes = [2, 16, 128], strides = [1, 1, 1]} : vector<2x18x128xbf16> to vector<2x16x128xbf16>
    %56 = vector.shape_cast %55 : vector<2x16x128xbf16> to vector<32x128xbf16>
    %c8 = arith.constant 8 : index
    %c0_36 = arith.constant 0 : index
    %c0_37 = arith.constant 0 : index
    %57 = vector.load %arg4[%c8, %c0_36, %c0_37] : memref<9x128x128xbf16, #tpu.memory_space<vmem>>, vector<1x128x128xbf16>
    %58 = vector.shape_cast %57 : vector<1x128x128xbf16> to vector<128x128xbf16>
    %cst_38 = arith.constant dense<0.000000e+00> : vector<32x128xf32>
    %59 = tpu.matmul %56, %58, %cst_38 {dimension_numbers = #tpu.dot_dimension_numbers<[1], [0], [0], [1], [0, 0, 1, 1], [], []>} : vector<32x128xbf16>, vector<128x128xbf16>, vector<32x128xf32> -> vector<32x128xf32>
    %60 = arith.addf %54, %59 : vector<32x128xf32>
    %c0_39 = arith.constant 0 : index
    %c0_40 = arith.constant 0 : index
    %61 = vector.load %arg5[%c0_39, %c0_40] : memref<1x128xf32, #tpu.memory_space<vmem>>, vector<1x128xf32>
    %62 = vector.broadcast %61 : vector<1x128xf32> to vector<32x128xf32>
    %63 = arith.addf %60, %62 : vector<32x128xf32>
    %c0_41 = arith.constant 0 : index
    %c0_42 = arith.constant 0 : index
    %c0_43 = arith.constant 0 : index
    %64 = vector.load %arg6[%c0_41, %c0_42, %c0_43] : memref<1x32x128xf32, #tpu.memory_space<vmem>>, vector<1x32x128xf32>
    %65 = vector.shape_cast %64 : vector<1x32x128xf32> to vector<32x128xf32>
    %66 = vector.shape_cast %63 : vector<32x128xf32> to vector<1x32x128xf32>
    tpu.vector_store %arg6[%c0_41, %c0_42, %c0_43], %66 {strides = array<i32>} : memref<1x32x128xf32, #tpu.memory_space<vmem>>, vector<1x32x128xf32>,
    %cst_44 = arith.constant dense<0.000000e+00> : vector<128xf32>
    %67 = vector.multi_reduction <add>, %63, %cst_44 [0] : vector<32x128xf32> to vector<128xf32>
    %68 = vector.shape_cast %67 : vector<128xf32> to vector<1x128xf32>
    %c0_45 = arith.constant 0 : index
    %c0_46 = arith.constant 0 : index
    %c0_47 = arith.constant 0 : index
    %69 = vector.load %arg7[%c0_45, %c0_46, %c0_47] : memref<1x2x128xf32, #tpu.memory_space<vmem>>, vector<1x1x128xf32>
    %70 = vector.shape_cast %69 : vector<1x1x128xf32> to vector<1x128xf32>
    %71 = vector.shape_cast %68 : vector<1x128xf32> to vector<1x1x128xf32>
    tpu.vector_store %arg7[%c0_45, %c0_46, %c0_47], %71 {strides = array<i32>} : memref<1x2x128xf32, #tpu.memory_space<vmem>>, vector<1x1x128xf32>,
    %72 = arith.mulf %63, %63 : vector<32x128xf32>
    %cst_48 = arith.constant dense<0.000000e+00> : vector<128xf32>
    %73 = vector.multi_reduction <add>, %72, %cst_48 [0] : vector<32x128xf32> to vector<128xf32>
    %74 = vector.shape_cast %73 : vector<128xf32> to vector<1x128xf32>
    %c0_49 = arith.constant 0 : index
    %c1_50 = arith.constant 1 : index
    %c0_51 = arith.constant 0 : index
    %75 = vector.load %arg7[%c0_49, %c1_50, %c0_51] : memref<1x2x128xf32, #tpu.memory_space<vmem>>, vector<1x1x128xf32>
    %76 = vector.shape_cast %75 : vector<1x1x128xf32> to vector<1x128xf32>
    %77 = vector.shape_cast %74 : vector<1x128xf32> to vector<1x1x128xf32>
    tpu.vector_store %arg7[%c0_49, %c1_50, %c0_51], %77 {strides = array<i32>} : memref<1x2x128xf32, #tpu.memory_space<vmem>>, vector<1x1x128xf32>,
    return
  }
  func.func @transform_0(%arg0: i32) -> (i32, i32, i32, i32) {
    %c0_i32 = arith.constant 0 : i32
    %c0_i32_0 = arith.constant 0 : i32
    %c0_i32_1 = arith.constant 0 : i32
    %c0_i32_2 = arith.constant 0 : i32
    return %c0_i32, %arg0, %c0_i32_0, %c0_i32_1 : i32, i32, i32, i32
  }
  func.func @transform_1(%arg0: i32) -> (i32, i32, i32, i32) {
    %c1_i32 = arith.constant 1 : i32
    %0 = arith.addi %arg0, %c1_i32 : i32
    %c0_i32 = arith.constant 0 : i32
    %c0_i32_0 = arith.constant 0 : i32
    %c0_i32_1 = arith.constant 0 : i32
    %c0_i32_2 = arith.constant 0 : i32
    return %c0_i32, %0, %c0_i32_0, %c0_i32_1 : i32, i32, i32, i32
  }
  func.func @transform_2(%arg0: i32) -> (i32, i32, i32, i32) {
    %c2_i32 = arith.constant 2 : i32
    %0 = arith.addi %arg0, %c2_i32 : i32
    %c0_i32 = arith.constant 0 : i32
    %c0_i32_0 = arith.constant 0 : i32
    %c0_i32_1 = arith.constant 0 : i32
    %c0_i32_2 = arith.constant 0 : i32
    return %c0_i32, %0, %c0_i32_0, %c0_i32_1 : i32, i32, i32, i32
  }
  func.func @transform_3(%arg0: i32) -> (i32, i32, i32) {
    %c0_i32 = arith.constant 0 : i32
    %c0_i32_0 = arith.constant 0 : i32
    %c0_i32_1 = arith.constant 0 : i32
    %c0_i32_2 = arith.constant 0 : i32
    return %c0_i32, %c0_i32_0, %c0_i32_1 : i32, i32, i32
  }
  func.func @transform_4(%arg0: i32) -> (i32, i32) {
    %c0_i32 = arith.constant 0 : i32
    %c0_i32_0 = arith.constant 0 : i32
    %c0_i32_1 = arith.constant 0 : i32
    return %c0_i32, %c0_i32_0 : i32, i32
  }
  func.func @transform_5(%arg0: i32) -> (i32, i32, i32) {
    %c0_i32 = arith.constant 0 : i32
    %c0_i32_0 = arith.constant 0 : i32
    %c0_i32_1 = arith.constant 0 : i32
    return %arg0, %c0_i32, %c0_i32_0 : i32, i32, i32
  }
  func.func @transform_6(%arg0: i32) -> (i32, i32, i32) {
    %c0_i32 = arith.constant 0 : i32
    %c0_i32_0 = arith.constant 0 : i32
    %c0_i32_1 = arith.constant 0 : i32
    return %arg0, %c0_i32, %c0_i32_0 : i32, i32, i32
  }
}

module attributes {stable_mosaic.version = 11 : i64} {
  func.func @_bn_relu_kernel(%arg0: i32, %arg1: memref<1x32x128xf32, #tpu.memory_space<vmem>>, %arg2: memref<1x128xf32, #tpu.memory_space<vmem>>, %arg3: memref<1x128xf32, #tpu.memory_space<vmem>>, %arg4: memref<1x32x128xf32, #tpu.memory_space<vmem>>) attributes {dimension_semantics = [#tpu.dimension_semantics<parallel>], iteration_bounds = array<i64: 16>, scalar_prefetch = 0 : i64, scratch_operands = 0 : i64, tpu.core_type = #tpu.core_type<tc>, window_params = [{transform_indices = @transform_0, window_bounds = array<i64: 1, 32, 128>}, {pipeline_mode = #tpu.pipeline_mode<synchronous>, transform_indices = @transform_1, window_bounds = array<i64: 1, 128>}, {pipeline_mode = #tpu.pipeline_mode<synchronous>, transform_indices = @transform_2, window_bounds = array<i64: 1, 128>}, {transform_indices = @transform_3, window_bounds = array<i64: 1, 32, 128>}]} {
    %c0 = arith.constant 0 : index
    %c0_0 = arith.constant 0 : index
    %c0_1 = arith.constant 0 : index
    %0 = vector.load %arg1[%c0, %c0_0, %c0_1] : memref<1x32x128xf32, #tpu.memory_space<vmem>>, vector<1x32x128xf32>
    %1 = vector.shape_cast %0 : vector<1x32x128xf32> to vector<32x128xf32>
    %c0_2 = arith.constant 0 : index
    %c0_3 = arith.constant 0 : index
    %2 = vector.load %arg2[%c0_2, %c0_3] : memref<1x128xf32, #tpu.memory_space<vmem>>, vector<1x128xf32>
    %3 = vector.broadcast %2 : vector<1x128xf32> to vector<32x128xf32>
    %4 = arith.mulf %1, %3 : vector<32x128xf32>
    %c0_4 = arith.constant 0 : index
    %c0_5 = arith.constant 0 : index
    %5 = vector.load %arg3[%c0_4, %c0_5] : memref<1x128xf32, #tpu.memory_space<vmem>>, vector<1x128xf32>
    %6 = vector.broadcast %5 : vector<1x128xf32> to vector<32x128xf32>
    %7 = arith.addf %4, %6 : vector<32x128xf32>
    %cst = arith.constant 0.000000e+00 : f32
    %8 = vector.broadcast %cst : f32 to vector<32x128xf32>
    %9 = arith.maximumf %7, %8 : vector<32x128xf32>
    %c0_6 = arith.constant 0 : index
    %c0_7 = arith.constant 0 : index
    %c0_8 = arith.constant 0 : index
    %10 = vector.load %arg4[%c0_6, %c0_7, %c0_8] : memref<1x32x128xf32, #tpu.memory_space<vmem>>, vector<1x32x128xf32>
    %11 = vector.shape_cast %10 : vector<1x32x128xf32> to vector<32x128xf32>
    %12 = vector.shape_cast %9 : vector<32x128xf32> to vector<1x32x128xf32>
    tpu.vector_store %arg4[%c0_6, %c0_7, %c0_8], %12 {strides = array<i32>} : memref<1x32x128xf32, #tpu.memory_space<vmem>>, vector<1x32x128xf32>,
    return
  }
  func.func @transform_0(%arg0: i32) -> (i32, i32, i32) {
    %c0_i32 = arith.constant 0 : i32
    %c0_i32_0 = arith.constant 0 : i32
    %c0_i32_1 = arith.constant 0 : i32
    return %arg0, %c0_i32, %c0_i32_0 : i32, i32, i32
  }
  func.func @transform_1(%arg0: i32) -> (i32, i32) {
    %c0_i32 = arith.constant 0 : i32
    %c0_i32_0 = arith.constant 0 : i32
    %c0_i32_1 = arith.constant 0 : i32
    return %c0_i32, %c0_i32_0 : i32, i32
  }
  func.func @transform_2(%arg0: i32) -> (i32, i32) {
    %c0_i32 = arith.constant 0 : i32
    %c0_i32_0 = arith.constant 0 : i32
    %c0_i32_1 = arith.constant 0 : i32
    return %c0_i32, %c0_i32_0 : i32, i32
  }
  func.func @transform_3(%arg0: i32) -> (i32, i32, i32) {
    %c0_i32 = arith.constant 0 : i32
    %c0_i32_0 = arith.constant 0 : i32
    %c0_i32_1 = arith.constant 0 : i32
    return %arg0, %c0_i32, %c0_i32_0 : i32, i32, i32
  }
}

</mosaic_0001>

<llo_original>
// kernel: encode_conv_forward.3
$region0: #{encode_conv_forward.3}
  #allocation0 [shape = 'u32[]', space=smem, size = 0x4, offset = 0x4, fixed_abs, tag = 'smem constant byte address 0x4 - core index']
  #allocation1 [shape = 'u32[72,128]{1,0:T(1,128)}', space=vmem, size = 0x9000, scoped, tag = 'internal scratch']
  %s0 = inlined_call_operand.vmem [shape: f32[16,32,128], index: 0, kind: input, shape index: {}]
  %s1 = inlined_call_operand.vmem [shape: f32[1,128], index: 1, kind: input, shape index: {}]
  %s2 = inlined_call_operand.vmem [shape: f32[1,128], index: 2, kind: input, shape index: {}]
  %s3 = inlined_call_operand.vmem [shape: f32[16,32,128], index: 3, kind: output, shape index: {}]
  %s4 = sld [smem:[#allocation0]]
  $region45: #{encode_conv_forward.3} parent=0
    _
  %s6 = ssub.s32 1, %s4
  %s7 = scalar_select 0, %s6, %s4
  loop: start=0, step=1, limit=18
  $region2: #{encode_conv_forward.3} parent=0 // loop_pre_header
    _
  $region3: #{encode_conv_forward.3} parent=0 // loop_header
    %s9 = sphi 0, %s13
    %p10 = scmp.ge.s32.totalorder %s9, 18
    %s19 = sphi 0, %s21
    %s22 = sphi 0, %s19
    %s23 = sphi 0, %s22
    %s39 = sphi 0, %s23
    %s43 = sphi 0, %s43
    %s45 = sphi 0, %s43
    %s46 = sphi 0, %s45
    %s60 = sphi 0, %s46
    %s64 = sphi 0, %s64
    %s66 = sphi 0, %s64
    %s67 = sphi 0, %s66
    %s81 = sphi 0, %s67
    %s87 = sphi 0, %s89
    %s90 = sphi 0, %s87
    %s91 = sphi 0, %s90
    %s107 = sphi 0, %s91
  $region4: #{encode_conv_forward.3} parent=0 // loop_header_branch
    %12 = sbr.rel (%p10) target = $region8
  $region5: #{encode_conv_forward.3} parent=0 // loop_body
    %s14 = ssub.s32 %s9, 1
    %s15 = ssub.s32 %s9, 2
    %s16 = sadd.s32 %s9, 1
    %s17 = ssub.s32 %s9, %s16
    %p18 = scmp.eq.s32.totalorder %s17, 0
    %s20 = sadd.s32 %s19, 1
    %s21 = scalar_select %p18, %s19, %s20
    %p24 = pneg %p18
    %p25 = scmp.eq.s32.totalorder %s9, 15
    %p26 = por %p24, %p25
    %p27 = scmp.ne.s32.totalorder %s19, %s22
    %p28 = scmp.eq.s32.totalorder %s9, 0
    %p29 = por %p27, %p28
    %p30 = scmp.ne.s32.totalorder %s19, %s22
    %p31 = scmp.eq.s32.totalorder %s14, 15
    %p32 = por %p30, %p31
    %p33 = scmp.ne.s32.totalorder %s22, %s23
    %p34 = scmp.eq.s32.totalorder %s14, 0
    %p35 = por %p33, %p34
    %p36 = scmp.ne.s32.totalorder %s22, %s23
    %p37 = scmp.eq.s32.totalorder %s15, 15
    %p38 = por %p36, %p37
    %p40 = scmp.ne.s32.totalorder %s23, %s39
    %p41 = scmp.eq.s32.totalorder %s15, 0
    %p42 = por %p40, %p41
    %s44 = sadd.s32 %s43, 1
    %p47 = scmp.eq.s32.totalorder %s9, 15
    %p48 = scmp.ne.s32.totalorder %s43, %s45
    %p49 = scmp.eq.s32.totalorder %s9, 0
    %p50 = por %p48, %p49
    %p51 = scmp.ne.s32.totalorder %s43, %s45
    %p52 = scmp.eq.s32.totalorder %s14, 15
    %p53 = por %p51, %p52
    %p54 = scmp.ne.s32.totalorder %s45, %s46
    %p55 = scmp.eq.s32.totalorder %s14, 0
    %p56 = por %p54, %p55
    %p57 = scmp.ne.s32.totalorder %s45, %s46
    %p58 = scmp.eq.s32.totalorder %s15, 15
    %p59 = por %p57, %p58
    %p61 = scmp.ne.s32.totalorder %s46, %s60
    %p62 = scmp.eq.s32.totalorder %s15, 0
    %p63 = por %p61, %p62
    %s65 = sadd.s32 %s64, 1
    %p68 = scmp.eq.s32.totalorder %s9, 15
    %p69 = scmp.ne.s32.totalorder %s64, %s66
    %p70 = scmp.eq.s32.totalorder %s9, 0
    %p71 = por %p69, %p70
    %p72 = scmp.ne.s32.totalorder %s64, %s66
    %p73 = scmp.eq.s32.totalorder %s14, 15
    %p74 = por %p72, %p73
    %p75 = scmp.ne.s32.totalorder %s66, %s67
    %p76 = scmp.eq.s32.totalorder %s14, 0
    %p77 = por %p75, %p76
    %p78 = scmp.ne.s32.totalorder %s66, %s67
    %p79 = scmp.eq.s32.totalorder %s15, 15
    %p80 = por %p78, %p79
    %p82 = scmp.ne.s32.totalorder %s67, %s81
    %p83 = scmp.eq.s32.totalorder %s15, 0
    %p84 = por %p82, %p83
    %s85 = ssub.s32 %s9, %s16
    %p86 = scmp.eq.s32.totalorder %s85, 0
    %s88 = sadd.s32 %s87, 1
    %s89 = scalar_select %p86, %s87, %s88
    %p92 = pneg %p86
    %p93 = scmp.eq.s32.totalorder %s9, 15
    %p94 = por %p92, %p93
    %p95 = scmp.ne.s32.totalorder %s87, %s90
    %p96 = scmp.eq.s32.totalorder %s9, 0
    %p97 = por %p95, %p96
    %p98 = scmp.ne.s32.totalorder %s87, %s90
    %p99 = scmp.eq.s32.totalorder %s14, 15
    %p100 = por %p98, %p99
    %p101 = scmp.ne.s32.totalorder %s90, %s91
    %p102 = scmp.eq.s32.totalorder %s14, 0
    %p103 = por %p101, %p102
    %p104 = scmp.ne.s32.totalorder %s90, %s91
    %p105 = scmp.eq.s32.totalorder %s15, 15
    %p106 = por %p104, %p105
    %p108 = scmp.ne.s32.totalorder %s91, %s107
    %p109 = scmp.eq.s32.totalorder %s15, 0
    %p110 = por %p108, %p109
    %p111 = scmp.le.s32.totalorder 1, %s9
    %p112 = scmp.lt.s32.totalorder %s9, 17
    %p113 = pnand %p111, %p112
    %p114 = pneg %p113
    // Predicated region
    $region9: #{encode_conv_forward.3} parent=5 // pred_check
      _
    $region10: #{encode_conv_forward.3} parent=5 // pred_check_branch
      %116 = sbr.rel (%p113) target = $region12
    $region11: #{encode_conv_forward.3} parent=5 // pred_region
      %s117 = ssub.s32 %s9, 1
      // Predicated region
      $region13: #{encode_conv_forward.3} parent=11 // pred_check
        %p118 = pneg %p56
      $region14: #{encode_conv_forward.3} parent=11 // pred_check_branch
        %120 = sbr.rel (%p118) target = $region16
      $region15: #{encode_conv_forward.3} parent=11 // pred_region
        _
      $region16: #{encode_conv_forward.3} parent=11 // pred_fallthru
        _
      // Predicated region
      $region17: #{encode_conv_forward.3} parent=11 // pred_check
        %p121 = pneg %p77
      $region18: #{encode_conv_forward.3} parent=11 // pred_check_branch
        %123 = sbr.rel (%p121) target = $region20
      $region19: #{encode_conv_forward.3} parent=11 // pred_region
        _
      $region20: #{encode_conv_forward.3} parent=11 // pred_fallthru
        _
    $region12: #{encode_conv_forward.3} parent=5 // pred_fallthru
      _
    %p124 = scmp.lt.s32.totalorder %s9, 16
    // Predicated region
    $region21: #{encode_conv_forward.3} parent=5 // pred_check
      %p125 = pneg %p124
    $region22: #{encode_conv_forward.3} parent=5 // pred_check_branch
      %127 = sbr.rel (%p125) target = $region24
    $region23: #{encode_conv_forward.3} parent=5 // pred_region
      // Predicated region
      $region25: #{encode_conv_forward.3} parent=23 // pred_check
        %p128 = pneg %p29
      $region26: #{encode_conv_forward.3} parent=23 // pred_check_branch
        %130 = sbr.rel (%p128) target = $region28
      $region27: #{encode_conv_forward.3} parent=23 // pred_region
        %p131 = scmp.lt.s32.totalorder %s9, 15
        %s132 = scalar_select %p131, %s9, 15
        %s133 = smul.addr %s132, 4
        %s134 = smul.addr %s133, 8
        %s135 = scalar_lea.vmem %s0, %s134
      $region28: #{encode_conv_forward.3} parent=23 // pred_fallthru
        _
    $region24: #{encode_conv_forward.3} parent=5 // pred_fallthru
      _
    %p136 = scmp.le.s32.totalorder 1, %s9
    %p137 = scmp.lt.s32.totalorder %s9, 17
    %p138 = pnand %p136, %p137
    %p139 = pneg %p138
    // Predicated region
    $region29: #{encode_conv_forward.3} parent=5 // pred_check
      _
    $region30: #{encode_conv_forward.3} parent=5 // pred_check_branch
      %141 = sbr.rel (%p138) target = $region32
    $region31: #{encode_conv_forward.3} parent=5 // pred_region
      %s142 = ssub.s32 %s9, 1
      %p143 = scmp.lt.s32.totalorder %s14, 15
      %s144 = scalar_select %p143, %s14, 15
      %s145 = smul.addr %s144, 4
      %s146 = smul.addr %s145, 8
      %s147 = scalar_lea.vmem %s0, %s146
      %p148 = pneg %p35
      %p149 = pneg %p32
      %p150 = pneg %p56
      %p151 = pneg %p53
      %p152 = pneg %p77
      %p153 = pneg %p74
      %p154 = pneg %p103
      %p155 = pneg %p100
      %p156 = scmp.lt.s32.totalorder %s14, 15
      %s157 = scalar_select %p156, %s14, 15
      %s158 = smul.addr %s157, 4
      %s159 = smul.addr %s158, 8
      %s160 = scalar_lea.vmem %s3, %s159
      %p161 = scmp.lt.s32.totalorder %s14, 15
      %s162 = scalar_select %p161, %s14, 15
      %s163 = smul.addr %s162, 4
      %s164 = smul.addr %s163, 8
      %s165 = scalar_lea.vmem %s0, %s164
      %p166 = scmp.lt.s32.totalorder %s14, 15
      %s167 = scalar_select %p166, %s14, 15
      %s168 = smul.addr %s167, 4
      %s169 = smul.addr %s168, 8
      %s170 = scalar_lea.vmem %s3, %s169
      %v171 = vld [vmem:[%s165] sm:$0xff]
      %v172 = vld [vmem:[%s165 + $0x8] sm:$0xff]
      %v173 = vld [vmem:[%s165 + $0x10] sm:$0xff]
      %v174 = vld [vmem:[%s165 + $0x18] sm:$0xff]
      %v175 = vld [vmem:[%s1] sm:$0x1]
      %v177 = vperm.slane %v175, 0
      %v179 = vmul.f32 %v171, %v177
      %v180 = vmul.f32 %v172, %v177
      %v181 = vmul.f32 %v173, %v177
      %v182 = vmul.f32 %v174, %v177
      %v183 = vld [vmem:[%s2] sm:$0x1]
      %v185 = vperm.slane %v183, 0
      %v187 = vadd.f32 %v179, %v185
      %v188 = vadd.f32 %v180, %v185
      %v189 = vadd.f32 %v181, %v185
      %v190 = vadd.f32 %v182, %v185
      %v191 = vmax.f32 %v187, 0.0
      %v192 = vmax.f32 %v188, 0.0
      %v193 = vmax.f32 %v189, 0.0
      %v194 = vmax.f32 %v190, 0.0
      %195 = vst [vmem:[%s170] sm:$0xff] %v191
      %196 = vst [vmem:[%s170 + $0x8] sm:$0xff] %v192
      %197 = vst [vmem:[%s170 + $0x10] sm:$0xff] %v193
      %198 = vst [vmem:[%s170 + $0x18] sm:$0xff] %v194
      %p199 = scmp.lt.s32.totalorder %s14, 15
      %s200 = scalar_select %p199, %s14, 15
      %s201 = smul.addr %s200, 4
      %s202 = smul.addr %s201, 8
      %s203 = scalar_lea.vmem %s3, %s202
      // Predicated region
      $region33: #{encode_conv_forward.3} parent=31 // pred_check
        %p204 = pneg %p100
      $region34: #{encode_conv_forward.3} parent=31 // pred_check_branch
        %206 = sbr.rel (%p204) target = $region36
      $region35: #{encode_conv_forward.3} parent=31 // pred_region
        _
      $region36: #{encode_conv_forward.3} parent=31 // pred_fallthru
        _
    $region32: #{encode_conv_forward.3} parent=5 // pred_fallthru
      _
    %p207 = scmp.le.s32.totalorder 2, %s9
    // Predicated region
    $region37: #{encode_conv_forward.3} parent=5 // pred_check
      %p208 = pneg %p207
    $region38: #{encode_conv_forward.3} parent=5 // pred_check_branch
      %210 = sbr.rel (%p208) target = $region40
    $region39: #{encode_conv_forward.3} parent=5 // pred_region
      %s211 = ssub.s32 %s9, 2
      // Predicated region
      $region41: #{encode_conv_forward.3} parent=39 // pred_check
        %p212 = pneg %p106
      $region42: #{encode_conv_forward.3} parent=39 // pred_check_branch
        %214 = sbr.rel (%p212) target = $region44
      $region43: #{encode_conv_forward.3} parent=39 // pred_region
        %p215 = scmp.lt.s32.totalorder %s15, 15
        %s216 = scalar_select %p215, %s15, 15
        %s217 = smul.addr %s216, 4
        %s218 = smul.addr %s217, 8
        %s219 = scalar_lea.vmem %s3, %s218
      $region44: #{encode_conv_forward.3} parent=39 // pred_fallthru
        _
    $region40: #{encode_conv_forward.3} parent=5 // pred_fallthru
      _
  $region6: #{encode_conv_forward.3} parent=0 // loop_footer
    %s13 = sadd.s32 1, %s9
  $region7: #{encode_conv_forward.3} parent=0 // loop_footer_branch
    %8 = sbr.rel target = $region3
  $region8: #{encode_conv_forward.3} parent=0 // loop_exit
    _

// kernel: encode_conv_forward.2
$region0: #{encode_conv_forward.2}
  #allocation0 [shape = 'u32[]', space=smem, size = 0x4, offset = 0x4, fixed_abs, tag = 'smem constant byte address 0x4 - core index']
  #allocation1 [shape = 'u32[72,128]{1,0:T(1,128)}', space=vmem, size = 0x9000, scoped, tag = 'internal scratch']
  %s0 = inlined_call_operand.vmem [shape: bf16[2,18,18,128], index: 0, kind: input, shape index: {}, may-alias: {0,1,2}]
  %s1 = inlined_call_operand.vmem [shape: bf16[2,18,18,128], index: 1, kind: input, shape index: {}, may-alias: {0,1,2}]
  %s2 = inlined_call_operand.vmem [shape: bf16[2,18,18,128], index: 2, kind: input, shape index: {}, may-alias: {0,1,2}]
  %s3 = inlined_call_operand.vmem [shape: bf16[9,128,128], index: 3, kind: input, shape index: {}]
  %s4 = inlined_call_operand.vmem [shape: f32[1,128], index: 4, kind: input, shape index: {}]
  %s5 = inlined_call_operand.vmem [shape: f32[16,32,128], index: 5, kind: output, shape index: {0}]
  %s6 = inlined_call_operand.vmem [shape: f32[16,2,128], index: 6, kind: output, shape index: {1}]
  %7 = xla_tuple %s5, %s6
  %s8 = sld [smem:[#allocation0]]
  $region184: #{encode_conv_forward.2} parent=0
    _
  %s10 = ssub.s32 1, %s8
  %s11 = scalar_select 0, %s10, %s8
  $region1: #{encode_conv_forward.2} parent=0
    #allocation2 [shape = 'u8[24576]{0}', space=vmem, size = 0x6000, scoped, tag = 'input window, operand 0']
    #allocation3 [shape = 'u8[24576]{0}', space=vmem, size = 0x6000, scoped, tag = 'input window, operand 1']
    #allocation4 [shape = 'u8[24576]{0}', space=vmem, size = 0x6000, scoped, tag = 'input window, operand 2']
    loop: start=0, step=1, limit=18
    $region2: #{encode_conv_forward.2} parent=1 // loop_pre_header
      _
    $region3: #{encode_conv_forward.2} parent=1 // loop_header
      %s13 = sphi 0, %s17
      %p14 = scmp.ge.s32.totalorder %s13, 18
      %s23 = sphi 0, %s25
      %s26 = sphi 0, %s23
      %s27 = sphi 0, %s26
      %s43 = sphi 0, %s27
      %s51 = sphi 0, %s53
      %s54 = sphi 0, %s51
      %s55 = sphi 0, %s54
      %s71 = sphi 0, %s55
      %s79 = sphi 0, %s81
      %s82 = sphi 0, %s79
      %s83 = sphi 0, %s82
      %s99 = sphi 0, %s83
      %s103 = sphi 0, %s103
      %s105 = sphi 0, %s103
      %s106 = sphi 0, %s105
      %s120 = sphi 0, %s106
      %s124 = sphi 0, %s124
      %s126 = sphi 0, %s124
      %s127 = sphi 0, %s126
      %s141 = sphi 0, %s127
      %s147 = sphi 0, %s149
      %s150 = sphi 0, %s147
      %s151 = sphi 0, %s150
      %s167 = sphi 0, %s151
      %s173 = sphi 0, %s175
      %s176 = sphi 0, %s173
      %s177 = sphi 0, %s176
      %s193 = sphi 0, %s177
    $region4: #{encode_conv_forward.2} parent=1 // loop_header_branch
      %16 = sbr.rel (%p14) target = $region8
    $region5: #{encode_conv_forward.2} parent=1 // loop_body
      %s18 = ssub.s32 %s13, 1
      %s19 = ssub.s32 %s13, 2
      %s20 = sadd.s32 %s13, 1
      %s21 = ssub.s32 %s13, %s20
      %p22 = scmp.eq.s32.totalorder %s21, 0
      %s24 = sadd.s32 %s23, 1
      %s25 = scalar_select %p22, %s23, %s24
      %p28 = pneg %p22
      %p29 = scmp.eq.s32.totalorder %s13, 15
      %p30 = por %p28, %p29
      %p31 = scmp.ne.s32.totalorder %s23, %s26
      %p32 = scmp.eq.s32.totalorder %s13, 0
      %p33 = por %p31, %p32
      %p34 = scmp.ne.s32.totalorder %s23, %s26
      %p35 = scmp.eq.s32.totalorder %s18, 15
      %p36 = por %p34, %p35
      %p37 = scmp.ne.s32.totalorder %s26, %s27
      %p38 = scmp.eq.s32.totalorder %s18, 0
      %p39 = por %p37, %p38
      %p40 = scmp.ne.s32.totalorder %s26, %s27
      %p41 = scmp.eq.s32.totalorder %s19, 15
      %p42 = por %p40, %p41
      %p44 = scmp.ne.s32.totalorder %s27, %s43
      %p45 = scmp.eq.s32.totalorder %s19, 0
      %p46 = por %p44, %p45
      %s47 = sadd.s32 %s13, 1
      %s48 = sadd.s32 %s20, 1
      %s49 = ssub.s32 %s47, %s48
      %p50 = scmp.eq.s32.totalorder %s49, 0
      %s52 = sadd.s32 %s51, 1
      %s53 = scalar_select %p50, %s51, %s52
      %p56 = pneg %p50
      %p57 = scmp.eq.s32.totalorder %s13, 15
      %p58 = por %p56, %p57
      %p59 = scmp.ne.s32.totalorder %s51, %s54
      %p60 = scmp.eq.s32.totalorder %s13, 0
      %p61 = por %p59, %p60
      %p62 = scmp.ne.s32.totalorder %s51, %s54
      %p63 = scmp.eq.s32.totalorder %s18, 15
      %p64 = por %p62, %p63
      %p65 = scmp.ne.s32.totalorder %s54, %s55
      %p66 = scmp.eq.s32.totalorder %s18, 0
      %p67 = por %p65, %p66
      %p68 = scmp.ne.s32.totalorder %s54, %s55
      %p69 = scmp.eq.s32.totalorder %s19, 15
      %p70 = por %p68, %p69
      %p72 = scmp.ne.s32.totalorder %s55, %s71
      %p73 = scmp.eq.s32.totalorder %s19, 0
      %p74 = por %p72, %p73
      %s75 = sadd.s32 %s13, 2
      %s76 = sadd.s32 %s20, 2
      %s77 = ssub.s32 %s75, %s76
      %p78 = scmp.eq.s32.totalorder %s77, 0
      %s80 = sadd.s32 %s79, 1
      %s81 = scalar_select %p78, %s79, %s80
      %p84 = pneg %p78
      %p85 = scmp.eq.s32.totalorder %s13, 15
      %p86 = por %p84, %p85
      %p87 = scmp.ne.s32.totalorder %s79, %s82
      %p88 = scmp.eq.s32.totalorder %s13, 0
      %p89 = por %p87, %p88
      %p90 = scmp.ne.s32.totalorder %s79, %s82
      %p91 = scmp.eq.s32.totalorder %s18, 15
      %p92 = por %p90, %p91
      %p93 = scmp.ne.s32.totalorder %s82, %s83
      %p94 = scmp.eq.s32.totalorder %s18, 0
      %p95 = por %p93, %p94
      %p96 = scmp.ne.s32.totalorder %s82, %s83
      %p97 = scmp.eq.s32.totalorder %s19, 15
      %p98 = por %p96, %p97
      %p100 = scmp.ne.s32.totalorder %s83, %s99
      %p101 = scmp.eq.s32.totalorder %s19, 0
      %p102 = por %p100, %p101
      %s104 = sadd.s32 %s103, 1
      %p107 = scmp.eq.s32.totalorder %s13, 15
      %p108 = scmp.ne.s32.totalorder %s103, %s105
      %p109 = scmp.eq.s32.totalorder %s13, 0
      %p110 = por %p108, %p109
      %p111 = scmp.ne.s32.totalorder %s103, %s105
      %p112 = scmp.eq.s32.totalorder %s18, 15
      %p113 = por %p111, %p112
      %p114 = scmp.ne.s32.totalorder %s105, %s106
      %p115 = scmp.eq.s32.totalorder %s18, 0
      %p116 = por %p114, %p115
      %p117 = scmp.ne.s32.totalorder %s105, %s106
      %p118 = scmp.eq.s32.totalorder %s19, 15
      %p119 = por %p117, %p118
      %p121 = scmp.ne.s32.totalorder %s106, %s120
      %p122 = scmp.eq.s32.totalorder %s19, 0
      %p123 = por %p121, %p122
      %s125 = sadd.s32 %s124, 1
      %p128 = scmp.eq.s32.totalorder %s13, 15
      %p129 = scmp.ne.s32.totalorder %s124, %s126
      %p130 = scmp.eq.s32.totalorder %s13, 0
      %p131 = por %p129, %p130
      %p132 = scmp.ne.s32.totalorder %s124, %s126
      %p133 = scmp.eq.s32.totalorder %s18, 15
      %p134 = por %p132, %p133
      %p135 = scmp.ne.s32.totalorder %s126, %s127
      %p136 = scmp.eq.s32.totalorder %s18, 0
      %p137 = por %p135, %p136
      %p138 = scmp.ne.s32.totalorder %s126, %s127
      %p139 = scmp.eq.s32.totalorder %s19, 15
      %p140 = por %p138, %p139
      %p142 = scmp.ne.s32.totalorder %s127, %s141
      %p143 = scmp.eq.s32.totalorder %s19, 0
      %p144 = por %p142, %p143
      %s145 = ssub.s32 %s13, %s20
      %p146 = scmp.eq.s32.totalorder %s145, 0
      %s148 = sadd.s32 %s147, 1
      %s149 = scalar_select %p146, %s147, %s148
      %p152 = pneg %p146
      %p153 = scmp.eq.s32.totalorder %s13, 15
      %p154 = por %p152, %p153
      %p155 = scmp.ne.s32.totalorder %s147, %s150
      %p156 = scmp.eq.s32.totalorder %s13, 0
      %p157 = por %p155, %p156
      %p158 = scmp.ne.s32.totalorder %s147, %s150
      %p159 = scmp.eq.s32.totalorder %s18, 15
      %p160 = por %p158, %p159
      %p161 = scmp.ne.s32.totalorder %s150, %s151
      %p162 = scmp.eq.s32.totalorder %s18, 0
      %p163 = por %p161, %p162
      %p164 = scmp.ne.s32.totalorder %s150, %s151
      %p165 = scmp.eq.s32.totalorder %s19, 15
      %p166 = por %p164, %p165
      %p168 = scmp.ne.s32.totalorder %s151, %s167
      %p169 = scmp.eq.s32.totalorder %s19, 0
      %p170 = por %p168, %p169
      %s171 = ssub.s32 %s13, %s20
      %p172 = scmp.eq.s32.totalorder %s171, 0
      %s174 = sadd.s32 %s173, 1
      %s175 = scalar_select %p172, %s173, %s174
      %p178 = pneg %p172
      %p179 = scmp.eq.s32.totalorder %s13, 15
      %p180 = por %p178, %p179
      %p181 = scmp.ne.s32.totalorder %s173, %s176
      %p182 = scmp.eq.s32.totalorder %s13, 0
      %p183 = por %p181, %p182
      %p184 = scmp.ne.s32.totalorder %s173, %s176
      %p185 = scmp.eq.s32.totalorder %s18, 15
      %p186 = por %p184, %p185
      %p187 = scmp.ne.s32.totalorder %s176, %s177
      %p188 = scmp.eq.s32.totalorder %s18, 0
      %p189 = por %p187, %p188
      %p190 = scmp.ne.s32.totalorder %s176, %s177
      %p191 = scmp.eq.s32.totalorder %s19, 15
      %p192 = por %p190, %p191
      %p194 = scmp.ne.s32.totalorder %s177, %s193
      %p195 = scmp.eq.s32.totalorder %s19, 0
      %p196 = por %p194, %p195
      %p197 = scmp.le.s32.totalorder 1, %s13
      %p198 = scmp.lt.s32.totalorder %s13, 17
      %p199 = pnand %p197, %p198
      %p200 = pneg %p199
      // Predicated region
      $region9: #{encode_conv_forward.2} parent=5 // pred_check
        _
      $region10: #{encode_conv_forward.2} parent=5 // pred_check_branch
        %202 = sbr.rel (%p199) target = $region12
      $region11: #{encode_conv_forward.2} parent=5 // pred_region
        %s203 = ssub.s32 %s13, 1
        // Predicated region
        $region13: #{encode_conv_forward.2} parent=11 // pred_check
          %p204 = pneg %p116
        $region14: #{encode_conv_forward.2} parent=11 // pred_check_branch
          %206 = sbr.rel (%p204) target = $region16
        $region15: #{encode_conv_forward.2} parent=11 // pred_region
          _
        $region16: #{encode_conv_forward.2} parent=11 // pred_fallthru
          _
        // Predicated region
        $region17: #{encode_conv_forward.2} parent=11 // pred_check
          %p207 = pneg %p137
        $region18: #{encode_conv_forward.2} parent=11 // pred_check_branch
          %209 = sbr.rel (%p207) target = $region20
        $region19: #{encode_conv_forward.2} parent=11 // pred_region
          _
        $region20: #{encode_conv_forward.2} parent=11 // pred_fallthru
          _
      $region12: #{encode_conv_forward.2} parent=5 // pred_fallthru
        _
      %p210 = scmp.lt.s32.totalorder %s13, 16
      // Predicated region
      $region21: #{encode_conv_forward.2} parent=5 // pred_check
        %p211 = pneg %p210
      $region22: #{encode_conv_forward.2} parent=5 // pred_check_branch
        %213 = sbr.rel (%p211) target = $region24
      $region23: #{encode_conv_forward.2} parent=5 // pred_region
        // Predicated region
        $region25: #{encode_conv_forward.2} parent=23 // pred_check
          %p214 = pneg %p33
        $region26: #{encode_conv_forward.2} parent=23 // pred_check_branch
          %216 = sbr.rel (%p214) target = $region28
        $region27: #{encode_conv_forward.2} parent=23 // pred_region
          %s217 = sand.u32 %s23, 1
          %s218 = sand.u32 %s23, 1
          %s219 = smul.addr %s218, 24
          %s220 = scalar_lea.vmem [#allocation2], %s219
          %s221 = smul.addr %s13, 3
          %s222 = smul.addr %s221, 4
          %s223 = scalar_lea.vmem %s0, %s222
          // Predicated region
          $region29: #{encode_conv_forward.2} parent=27 // pred_check
            _
          $region30: #{encode_conv_forward.2} parent=27 // pred_check_branch
            %225 = sbr.rel (0) target = $region32
          $region31: #{encode_conv_forward.2} parent=27 // pred_region
            // Predicated region
            $region33: #{encode_conv_forward.2} parent=31 // pred_check
              _
            $region34: #{encode_conv_forward.2} parent=31 // pred_check_branch
              %227 = sbr.rel target = $region36
            $region35: #{encode_conv_forward.2} parent=31 // pred_region
              // Predicated region
              $region48: #{encode_conv_forward.2} parent=35 // pred_check
                _
              $region49: #{encode_conv_forward.2} parent=35 // pred_check_branch
                %253 = sbr.rel (0) target = $region51
              $region50: #{encode_conv_forward.2} parent=35 // pred_region
                loop: start=0, step=1, limit=1
                $region52: #{encode_conv_forward.2} parent=50 // loop_pre_header
                  _
                $region53: #{encode_conv_forward.2} parent=50 // loop_header
                  %s255 = sphi 0, %s259
                  %p256 = scmp.ge.s32.totalorder %s255, 1
                  %s260 = sphi %s223, %s223
                  %s261 = sphi %s220, %s220
                $region54: #{encode_conv_forward.2} parent=50 // loop_header_branch
                  %258 = sbr.rel (%p256) target = $region58
                $region55: #{encode_conv_forward.2} parent=50 // loop_body
                  _
                $region56: #{encode_conv_forward.2} parent=50 // loop_footer
                  %s259 = sadd.s32 1, %s255
                $region57: #{encode_conv_forward.2} parent=50 // loop_footer_branch
                  %254 = sbr.rel target = $region53
                $region58: #{encode_conv_forward.2} parent=50 // loop_exit
                  _
                %s263 = ssub.s32 16, 1
                loop: start=0, step=1, limit=1
                $region59: #{encode_conv_forward.2} parent=50 // loop_pre_header
                  _
                $region60: #{encode_conv_forward.2} parent=50 // loop_header
                  %s265 = sphi 0, %s269
                  %p266 = scmp.ge.s32.totalorder %s265, 1
                  %s270 = sphi %s223, %s223
                  %s271 = sphi %s220, %s220
                $region61: #{encode_conv_forward.2} parent=50 // loop_header_branch
                  %268 = sbr.rel (%p266) target = $region65
                $region62: #{encode_conv_forward.2} parent=50 // loop_body
                  %v272 = vld [vmem:[%s270] sm:%s263]
                  %273 = vst [vmem:[%s271] sm:%s263] %v272
                  %v274 = vld [vmem:[%s270 + $0x4] sm:%s263]
                  %275 = vst [vmem:[%s271 + $0x4] sm:%s263] %v274
                  %v276 = vld [vmem:[%s270 + $0x8] sm:%s263]
                  %277 = vst [vmem:[%s271 + $0x8] sm:%s263] %v276
                  %v278 = vld [vmem:[%s270 + $0xd8] sm:%s263]
                  %279 = vst [vmem:[%s271 + $0xc] sm:%s263] %v278
                  %v280 = vld [vmem:[%s270 + $0xdc] sm:%s263]
                  %281 = vst [vmem:[%s271 + $0x10] sm:%s263] %v280
                  %v282 = vld [vmem:[%s270 + $0xe0] sm:%s263]
                  %283 = vst [vmem:[%s271 + $0x14] sm:%s263] %v282
                $region63: #{encode_conv_forward.2} parent=50 // loop_footer
                  %s269 = sadd.s32 1, %s265
                $region64: #{encode_conv_forward.2} parent=50 // loop_footer_branch
                  %264 = sbr.rel target = $region60
                $region65: #{encode_conv_forward.2} parent=50 // loop_exit
                  _
              $region51: #{encode_conv_forward.2} parent=35 // pred_fallthru
                _
            $region36: #{encode_conv_forward.2} parent=31 // pred_fallthru
              _
            // Predicated region
            $region37: #{encode_conv_forward.2} parent=31 // pred_check
              _
            $region38: #{encode_conv_forward.2} parent=31 // pred_check_branch
              %229 = sbr.rel (0) target = $region40
            $region39: #{encode_conv_forward.2} parent=31 // pred_region
              %s231 = ssub.s32 16, 1
              loop: start=0, step=1, limit=1
              $region41: #{encode_conv_forward.2} parent=39 // loop_pre_header
                _
              $region42: #{encode_conv_forward.2} parent=39 // loop_header
                %s233 = sphi 0, %s237
                %p234 = scmp.ge.s32.totalorder %s233, 1
                %s238 = sphi %s223, %s223
                %s239 = sphi %s220, %s220
              $region43: #{encode_conv_forward.2} parent=39 // loop_header_branch
                %236 = sbr.rel (%p234) target = $region47
              $region44: #{encode_conv_forward.2} parent=39 // loop_body
                %v240 = vld [vmem:[%s238] sm:%s231]
                %241 = vst [vmem:[%s239] sm:%s231] %v240
                %v242 = vld [vmem:[%s238 + $0x4] sm:%s231]
                %243 = vst [vmem:[%s239 + $0x4] sm:%s231] %v242
                %v244 = vld [vmem:[%s238 + $0x8] sm:%s231]
                %245 = vst [vmem:[%s239 + $0x8] sm:%s231] %v244
                %v246 = vld [vmem:[%s238 + $0xd8] sm:%s231]
                %247 = vst [vmem:[%s239 + $0xc] sm:%s231] %v246
                %v248 = vld [vmem:[%s238 + $0xdc] sm:%s231]
                %249 = vst [vmem:[%s239 + $0x10] sm:%s231] %v248
                %v250 = vld [vmem:[%s238 + $0xe0] sm:%s231]
                %251 = vst [vmem:[%s239 + $0x14] sm:%s231] %v250
              $region45: #{encode_conv_forward.2} parent=39 // loop_footer
                %s237 = sadd.s32 1, %s233
              $region46: #{encode_conv_forward.2} parent=39 // loop_footer_branch
                %232 = sbr.rel target = $region42
              $region47: #{encode_conv_forward.2} parent=39 // loop_exit
                _
            $region40: #{encode_conv_forward.2} parent=31 // pred_fallthru
              _
          $region32: #{encode_conv_forward.2} parent=27 // pred_fallthru
            _
          %284 = vnop
        $region28: #{encode_conv_forward.2} parent=23 // pred_fallthru
          _
        // Predicated region
        $region66: #{encode_conv_forward.2} parent=23 // pred_check
          %p285 = pneg %p61
        $region67: #{encode_conv_forward.2} parent=23 // pred_check_branch
          %287 = sbr.rel (%p285) target = $region69
        $region68: #{encode_conv_forward.2} parent=23 // pred_region
          %s288 = sand.u32 %s51, 1
          %s289 = sand.u32 %s51, 1
          %s290 = smul.addr %s289, 24
          %s291 = scalar_lea.vmem [#allocation3], %s290
          %s292 = sadd.s32 %s13, 1
          %s293 = smul.addr %s292, 3
          %s294 = smul.addr %s293, 4
          %s295 = scalar_lea.vmem %s1, %s294
          // Predicated region
          $region70: #{encode_conv_forward.2} parent=68 // pred_check
            _
          $region71: #{encode_conv_forward.2} parent=68 // pred_check_branch
            %297 = sbr.rel (0) target = $region73
          $region72: #{encode_conv_forward.2} parent=68 // pred_region
            // Predicated region
            $region74: #{encode_conv_forward.2} parent=72 // pred_check
              _
            $region75: #{encode_conv_forward.2} parent=72 // pred_check_branch
              %299 = sbr.rel target = $region77
            $region76: #{encode_conv_forward.2} parent=72 // pred_region
              // Predicated region
              $region89: #{encode_conv_forward.2} parent=76 // pred_check
                _
              $region90: #{encode_conv_forward.2} parent=76 // pred_check_branch
                %325 = sbr.rel (0) target = $region92
              $region91: #{encode_conv_forward.2} parent=76 // pred_region
                loop: start=0, step=1, limit=1
                $region93: #{encode_conv_forward.2} parent=91 // loop_pre_header
                  _
                $region94: #{encode_conv_forward.2} parent=91 // loop_header
                  %s327 = sphi 0, %s331
                  %p328 = scmp.ge.s32.totalorder %s327, 1
                  %s332 = sphi %s295, %s295
                  %s333 = sphi %s291, %s291
                $region95: #{encode_conv_forward.2} parent=91 // loop_header_branch
                  %330 = sbr.rel (%p328) target = $region99
                $region96: #{encode_conv_forward.2} parent=91 // loop_body
                  _
                $region97: #{encode_conv_forward.2} parent=91 // loop_footer
                  %s331 = sadd.s32 1, %s327
                $region98: #{encode_conv_forward.2} parent=91 // loop_footer_branch
                  %326 = sbr.rel target = $region94
                $region99: #{encode_conv_forward.2} parent=91 // loop_exit
                  _
                %s335 = ssub.s32 16, 1
                loop: start=0, step=1, limit=1
                $region100: #{encode_conv_forward.2} parent=91 // loop_pre_header
                  _
                $region101: #{encode_conv_forward.2} parent=91 // loop_header
                  %s337 = sphi 0, %s341
                  %p338 = scmp.ge.s32.totalorder %s337, 1
                  %s342 = sphi %s295, %s295
                  %s343 = sphi %s291, %s291
                $region102: #{encode_conv_forward.2} parent=91 // loop_header_branch
                  %340 = sbr.rel (%p338) target = $region106
                $region103: #{encode_conv_forward.2} parent=91 // loop_body
                  %v344 = vld [vmem:[%s342] sm:%s335]
                  %345 = vst [vmem:[%s343] sm:%s335] %v344
                  %v346 = vld [vmem:[%s342 + $0x4] sm:%s335]
                  %347 = vst [vmem:[%s343 + $0x4] sm:%s335] %v346
                  %v348 = vld [vmem:[%s342 + $0x8] sm:%s335]
                  %349 = vst [vmem:[%s343 + $0x8] sm:%s335] %v348
                  %v350 = vld [vmem:[%s342 + $0xd8] sm:%s335]
                  %351 = vst [vmem:[%s343 + $0xc] sm:%s335] %v350
                  %v352 = vld [vmem:[%s342 + $0xdc] sm:%s335]
                  %353 = vst [vmem:[%s343 + $0x10] sm:%s335] %v352
                  %v354 = vld [vmem:[%s342 + $0xe0] sm:%s335]
                  %355 = vst [vmem:[%s343 + $0x14] sm:%s335] %v354
                $region104: #{encode_conv_forward.2} parent=91 // loop_footer
                  %s341 = sadd.s32 1, %s337
                $region105: #{encode_conv_forward.2} parent=91 // loop_footer_branch
                  %336 = sbr.rel target = $region101
                $region106: #{encode_conv_forward.2} parent=91 // loop_exit
                  _
              $region92: #{encode_conv_forward.2} parent=76 // pred_fallthru
                _
            $region77: #{encode_conv_forward.2} parent=72 // pred_fallthru
              _
            // Predicated region
            $region78: #{encode_conv_forward.2} parent=72 // pred_check
              _
            $region79: #{encode_conv_forward.2} parent=72 // pred_check_branch
              %301 = sbr.rel (0) target = $region81
            $region80: #{encode_conv_forward.2} parent=72 // pred_region
              %s303 = ssub.s32 16, 1
              loop: start=0, step=1, limit=1
              $region82: #{encode_conv_forward.2} parent=80 // loop_pre_header
                _
              $region83: #{encode_conv_forward.2} parent=80 // loop_header
                %s305 = sphi 0, %s309
                %p306 = scmp.ge.s32.totalorder %s305, 1
                %s310 = sphi %s295, %s295
                %s311 = sphi %s291, %s291
              $region84: #{encode_conv_forward.2} parent=80 // loop_header_branch
                %308 = sbr.rel (%p306) target = $region88
              $region85: #{encode_conv_forward.2} parent=80 // loop_body
                %v312 = vld [vmem:[%s310] sm:%s303]
                %313 = vst [vmem:[%s311] sm:%s303] %v312
                %v314 = vld [vmem:[%s310 + $0x4] sm:%s303]
                %315 = vst [vmem:[%s311 + $0x4] sm:%s303] %v314
                %v316 = vld [vmem:[%s310 + $0x8] sm:%s303]
                %317 = vst [vmem:[%s311 + $0x8] sm:%s303] %v316
                %v318 = vld [vmem:[%s310 + $0xd8] sm:%s303]
                %319 = vst [vmem:[%s311 + $0xc] sm:%s303] %v318
                %v320 = vld [vmem:[%s310 + $0xdc] sm:%s303]
                %321 = vst [vmem:[%s311 + $0x10] sm:%s303] %v320
                %v322 = vld [vmem:[%s310 + $0xe0] sm:%s303]
                %323 = vst [vmem:[%s311 + $0x14] sm:%s303] %v322
              $region86: #{encode_conv_forward.2} parent=80 // loop_footer
                %s309 = sadd.s32 1, %s305
              $region87: #{encode_conv_forward.2} parent=80 // loop_footer_branch
                %304 = sbr.rel target = $region83
              $region88: #{encode_conv_forward.2} parent=80 // loop_exit
                _
            $region81: #{encode_conv_forward.2} parent=72 // pred_fallthru
              _
          $region73: #{encode_conv_forward.2} parent=68 // pred_fallthru
            _
          %356 = vnop
        $region69: #{encode_conv_forward.2} parent=23 // pred_fallthru
          _
        // Predicated region
        $region107: #{encode_conv_forward.2} parent=23 // pred_check
          %p357 = pneg %p89
        $region108: #{encode_conv_forward.2} parent=23 // pred_check_branch
          %359 = sbr.rel (%p357) target = $region110
        $region109: #{encode_conv_forward.2} parent=23 // pred_region
          %s360 = sand.u32 %s79, 1
          %s361 = sand.u32 %s79, 1
          %s362 = smul.addr %s361, 24
          %s363 = scalar_lea.vmem [#allocation4], %s362
          %s364 = sadd.s32 %s13, 2
          %s365 = smul.addr %s364, 3
          %s366 = smul.addr %s365, 4
          %s367 = scalar_lea.vmem %s2, %s366
          // Predicated region
          $region111: #{encode_conv_forward.2} parent=109 // pred_check
            _
          $region112: #{encode_conv_forward.2} parent=109 // pred_check_branch
            %369 = sbr.rel (0) target = $region114
          $region113: #{encode_conv_forward.2} parent=109 // pred_region
            // Predicated region
            $region115: #{encode_conv_forward.2} parent=113 // pred_check
              _
            $region116: #{encode_conv_forward.2} parent=113 // pred_check_branch
              %371 = sbr.rel target = $region118
            $region117: #{encode_conv_forward.2} parent=113 // pred_region
              // Predicated region
              $region130: #{encode_conv_forward.2} parent=117 // pred_check
                _
              $region131: #{encode_conv_forward.2} parent=117 // pred_check_branch
                %397 = sbr.rel (0) target = $region133
              $region132: #{encode_conv_forward.2} parent=117 // pred_region
                loop: start=0, step=1, limit=1
                $region134: #{encode_conv_forward.2} parent=132 // loop_pre_header
                  _
                $region135: #{encode_conv_forward.2} parent=132 // loop_header
                  %s399 = sphi 0, %s403
                  %p400 = scmp.ge.s32.totalorder %s399, 1
                  %s404 = sphi %s367, %s367
                  %s405 = sphi %s363, %s363
                $region136: #{encode_conv_forward.2} parent=132 // loop_header_branch
                  %402 = sbr.rel (%p400) target = $region140
                $region137: #{encode_conv_forward.2} parent=132 // loop_body
                  _
                $region138: #{encode_conv_forward.2} parent=132 // loop_footer
                  %s403 = sadd.s32 1, %s399
                $region139: #{encode_conv_forward.2} parent=132 // loop_footer_branch
                  %398 = sbr.rel target = $region135
                $region140: #{encode_conv_forward.2} parent=132 // loop_exit
                  _
                %s407 = ssub.s32 16, 1
                loop: start=0, step=1, limit=1
                $region141: #{encode_conv_forward.2} parent=132 // loop_pre_header
                  _
                $region142: #{encode_conv_forward.2} parent=132 // loop_header
                  %s409 = sphi 0, %s413
                  %p410 = scmp.ge.s32.totalorder %s409, 1
                  %s414 = sphi %s367, %s367
                  %s415 = sphi %s363, %s363
                $region143: #{encode_conv_forward.2} parent=132 // loop_header_branch
                  %412 = sbr.rel (%p410) target = $region147
                $region144: #{encode_conv_forward.2} parent=132 // loop_body
                  %v416 = vld [vmem:[%s414] sm:%s407]
                  %417 = vst [vmem:[%s415] sm:%s407] %v416
                  %v418 = vld [vmem:[%s414 + $0x4] sm:%s407]
                  %419 = vst [vmem:[%s415 + $0x4] sm:%s407] %v418
                  %v420 = vld [vmem:[%s414 + $0x8] sm:%s407]
                  %421 = vst [vmem:[%s415 + $0x8] sm:%s407] %v420
                  %v422 = vld [vmem:[%s414 + $0xd8] sm:%s407]
                  %423 = vst [vmem:[%s415 + $0xc] sm:%s407] %v422
                  %v424 = vld [vmem:[%s414 + $0xdc] sm:%s407]
                  %425 = vst [vmem:[%s415 + $0x10] sm:%s407] %v424
                  %v426 = vld [vmem:[%s414 + $0xe0] sm:%s407]
                  %427 = vst [vmem:[%s415 + $0x14] sm:%s407] %v426
                $region145: #{encode_conv_forward.2} parent=132 // loop_footer
                  %s413 = sadd.s32 1, %s409
                $region146: #{encode_conv_forward.2} parent=132 // loop_footer_branch
                  %408 = sbr.rel target = $region142
                $region147: #{encode_conv_forward.2} parent=132 // loop_exit
                  _
              $region133: #{encode_conv_forward.2} parent=117 // pred_fallthru
                _
            $region118: #{encode_conv_forward.2} parent=113 // pred_fallthru
              _
            // Predicated region
            $region119: #{encode_conv_forward.2} parent=113 // pred_check
              _
            $region120: #{encode_conv_forward.2} parent=113 // pred_check_branch
              %373 = sbr.rel (0) target = $region122
            $region121: #{encode_conv_forward.2} parent=113 // pred_region
              %s375 = ssub.s32 16, 1
              loop: start=0, step=1, limit=1
              $region123: #{encode_conv_forward.2} parent=121 // loop_pre_header
                _
              $region124: #{encode_conv_forward.2} parent=121 // loop_header
                %s377 = sphi 0, %s381
                %p378 = scmp.ge.s32.totalorder %s377, 1
                %s382 = sphi %s367, %s367
                %s383 = sphi %s363, %s363
              $region125: #{encode_conv_forward.2} parent=121 // loop_header_branch
                %380 = sbr.rel (%p378) target = $region129
              $region126: #{encode_conv_forward.2} parent=121 // loop_body
                %v384 = vld [vmem:[%s382] sm:%s375]
                %385 = vst [vmem:[%s383] sm:%s375] %v384
                %v386 = vld [vmem:[%s382 + $0x4] sm:%s375]
                %387 = vst [vmem:[%s383 + $0x4] sm:%s375] %v386
                %v388 = vld [vmem:[%s382 + $0x8] sm:%s375]
                %389 = vst [vmem:[%s383 + $0x8] sm:%s375] %v388
                %v390 = vld [vmem:[%s382 + $0xd8] sm:%s375]
                %391 = vst [vmem:[%s383 + $0xc] sm:%s375] %v390
                %v392 = vld [vmem:[%s382 + $0xdc] sm:%s375]
                %393 = vst [vmem:[%s383 + $0x10] sm:%s375] %v392
                %v394 = vld [vmem:[%s382 + $0xe0] sm:%s375]
                %395 = vst [vmem:[%s383 + $0x14] sm:%s375] %v394
              $region127: #{encode_conv_forward.2} parent=121 // loop_footer
                %s381 = sadd.s32 1, %s377
              $region128: #{encode_conv_forward.2} parent=121 // loop_footer_branch
                %376 = sbr.rel target = $region124
              $region129: #{encode_conv_forward.2} parent=121 // loop_exit
                _
            $region122: #{encode_conv_forward.2} parent=113 // pred_fallthru
              _
          $region114: #{encode_conv_forward.2} parent=109 // pred_fallthru
            _
          %428 = vnop
        $region110: #{encode_conv_forward.2} parent=23 // pred_fallthru
          _
      $region24: #{encode_conv_forward.2} parent=5 // pred_fallthru
        _
      %p429 = scmp.le.s32.totalorder 1, %s13
      %p430 = scmp.lt.s32.totalorder %s13, 17
      %p431 = pnand %p429, %p430
      %p432 = pneg %p431
      // Predicated region
      $region148: #{encode_conv_forward.2} parent=5 // pred_check
        _
      $region149: #{encode_conv_forward.2} parent=5 // pred_check_branch
        %434 = sbr.rel (%p431) target = $region151
      $region150: #{encode_conv_forward.2} parent=5 // pred_region
        %s435 = ssub.s32 %s13, 1
        %s436 = sand.u32 %s26, 1
        %s437 = sand.u32 %s26, 1
        %s438 = smul.addr %s437, 24
        %s439 = scalar_lea.vmem [#allocation2], %s438
        // Predicated region
        $region152: #{encode_conv_forward.2} parent=150 // pred_check
          %p440 = pneg %p39
        $region153: #{encode_conv_forward.2} parent=150 // pred_check_branch
          %442 = sbr.rel (%p440) target = $region155
        $region154: #{encode_conv_forward.2} parent=150 // pred_region
          _
        $region155: #{encode_conv_forward.2} parent=150 // pred_fallthru
          _
        %s443 = sand.u32 %s54, 1
        %s444 = sand.u32 %s54, 1
        %s445 = smul.addr %s444, 24
        %s446 = scalar_lea.vmem [#allocation3], %s445
        // Predicated region
        $region156: #{encode_conv_forward.2} parent=150 // pred_check
          %p447 = pneg %p67
        $region157: #{encode_conv_forward.2} parent=150 // pred_check_branch
          %449 = sbr.rel (%p447) target = $region159
        $region158: #{encode_conv_forward.2} parent=150 // pred_region
          _
        $region159: #{encode_conv_forward.2} parent=150 // pred_fallthru
          _
        %s450 = sand.u32 %s82, 1
        %s451 = sand.u32 %s82, 1
        %s452 = smul.addr %s451, 24
        %s453 = scalar_lea.vmem [#allocation4], %s452
        // Predicated region
        $region160: #{encode_conv_forward.2} parent=150 // pred_check
          %p454 = pneg %p95
        $region161: #{encode_conv_forward.2} parent=150 // pred_check_branch
          %456 = sbr.rel (%p454) target = $region163
        $region162: #{encode_conv_forward.2} parent=150 // pred_region
          _
        $region163: #{encode_conv_forward.2} parent=150 // pred_fallthru
          _
        %s457 = sand.u32 %s26, 1
        %s458 = sand.u32 %s26, 1
        %s459 = smul.addr %s458, 24
        %s460 = scalar_lea.vmem [#allocation2], %s459
        %p461 = pneg %p39
        %p462 = pneg %p36
        %s463 = sand.u32 %s54, 1
        %s464 = sand.u32 %s54, 1
        %s465 = smul.addr %s464, 24
        %s466 = scalar_lea.vmem [#allocation3], %s465
        %p467 = pneg %p67
        %p468 = pneg %p64
        %s469 = sand.u32 %s82, 1
        %s470 = sand.u32 %s82, 1
        %s471 = smul.addr %s470, 24
        %s472 = scalar_lea.vmem [#allocation4], %s471
        %p473 = pneg %p95
        %p474 = pneg %p92
        %p475 = pneg %p116
        %p476 = pneg %p113
        %p477 = pneg %p137
        %p478 = pneg %p134
        %p479 = pneg %p163
        %p480 = pneg %p160
        %p481 = scmp.lt.s32.totalorder %s18, 15
        %s482 = scalar_select %p481, %s18, 15
        %s483 = smul.addr %s482, 4
        %s484 = smul.addr %s483, 8
        %s485 = scalar_lea.vmem %s5, %s484
        %p486 = pneg %p189
        %p487 = pneg %p186
        %p488 = scmp.lt.s32.totalorder %s18, 15
        %s489 = scalar_select %p488, %s18, 15
        %s490 = smul.addr %s489, 2
        %s491 = scalar_lea.vmem %s6, %s490
        %s492 = sadd.s32 %s18, 1
        %s493 = sadd.s32 %s18, 2
        %p494 = scmp.lt.s32.totalorder %s18, 15
        %s495 = scalar_select %p494, %s18, 15
        %s496 = smul.addr %s495, 4
        %s497 = smul.addr %s496, 8
        %s498 = scalar_lea.vmem %s5, %s497
        %p499 = scmp.lt.s32.totalorder %s18, 15
        %s500 = scalar_select %p499, %s18, 15
        %s501 = smul.addr %s500, 2
        %s502 = scalar_lea.vmem %s6, %s501
        %v503 = vld [vmem:[%s439] sm:$0xf]
        %v504 = vld [vmem:[%s439 + $0x4] sm:$0xf]
        %v505 = vld [vmem:[%s439 + $0x8] sm:$0x1]
        %v506 = vld [vmem:[%s439 + $0xc] sm:$0xf]
        %v507 = vld [vmem:[%s439 + $0x10] sm:$0xf]
        %v508 = vld [vmem:[%s439 + $0x14] sm:$0x1]
        %v509 = vld [vmem:[%s3] sm:$0xf]
        %v510 = vld [vmem:[%s3 + $0x4] sm:$0xf]
        %v511 = vld [vmem:[%s3 + $0x8] sm:$0xf]
        %v512 = vld [vmem:[%s3 + $0xc] sm:$0xf]
        %v513 = vld [vmem:[%s3 + $0x10] sm:$0xf]
        %v514 = vld [vmem:[%s3 + $0x14] sm:$0xf]
        %v515 = vld [vmem:[%s3 + $0x18] sm:$0xf]
        %v516 = vld [vmem:[%s3 + $0x1c] sm:$0xf]
        %v517 = vld [vmem:[%s3 + $0x20] sm:$0xf]
        %v518 = vld [vmem:[%s3 + $0x24] sm:$0xf]
        %v519 = vld [vmem:[%s3 + $0x28] sm:$0xf]
        %v520 = vld [vmem:[%s3 + $0x2c] sm:$0xf]
        %v521 = vld [vmem:[%s3 + $0x30] sm:$0xf]
        %v522 = vld [vmem:[%s3 + $0x34] sm:$0xf]
        %v523 = vld [vmem:[%s3 + $0x38] sm:$0xf]
        %v524 = vld [vmem:[%s3 + $0x3c] sm:$0xf]
        %vm525 = vsmask.f32 3328
        %vm526 = vsmask.f32 7440
        %vm527 = vmor %vm525, %vm526
        %v529 = vshrl.u32 %v503, 16
        %v531 = vrot.slane %v529, 4
        %v532 = vshll.u32 %v503, 16
        %v534 = vrot.slane %v532, 5
        %v535 = vor.u32 %v531, %v534
        %v536 = vrot.slane %v535, 4
        %v538 = vshll.u32 %v504, 16
        %v540 = vrot.slane %v538, 5
        %v541 = vsel %vm527, %v536, %v540
        %v542 = vshrl.u32 %v504, 16
        %v544 = vrot.slane %v542, 4
        %v545 = vor.u32 %v544, %v540
        %v546 = vrot.slane %v545, 4
        %v548 = vshll.u32 %v505, 16
        %v550 = vrot.slane %v548, 5
        %v551 = vsel %vm527, %v546, %v550
        %v553 = vshrl.u32 %v506, 16
        %v555 = vrot.slane %v553, 4
        %v556 = vshll.u32 %v506, 16
        %v558 = vrot.slane %v556, 5
        %v559 = vor.u32 %v555, %v558
        %v560 = vrot.slane %v559, 4
        %v562 = vshll.u32 %v507, 16
        %v564 = vrot.slane %v562, 5
        %v565 = vsel %vm527, %v560, %v564
        %v566 = vshrl.u32 %v507, 16
        %v568 = vrot.slane %v566, 4
        %v569 = vor.u32 %v568, %v564
        %v570 = vrot.slane %v569, 4
        %v572 = vshll.u32 %v508, 16
        %v574 = vrot.slane %v572, 5
        %v575 = vsel %vm527, %v570, %v574
        %s576 = scalar_lea.vmem %s3, 64
        %v577 = vld [vmem:[%s576] sm:$0xf]
        %v578 = vld [vmem:[%s576 + $0x4] sm:$0xf]
        %v579 = vld [vmem:[%s576 + $0x8] sm:$0xf]
        %v580 = vld [vmem:[%s576 + $0xc] sm:$0xf]
        %v581 = vld [vmem:[%s576 + $0x10] sm:$0xf]
        %v582 = vld [vmem:[%s576 + $0x14] sm:$0xf]
        %v583 = vld [vmem:[%s576 + $0x18] sm:$0xf]
        %v584 = vld [vmem:[%s576 + $0x1c] sm:$0xf]
        %v585 = vld [vmem:[%s576 + $0x20] sm:$0xf]
        %v586 = vld [vmem:[%s576 + $0x24] sm:$0xf]
        %v587 = vld [vmem:[%s576 + $0x28] sm:$0xf]
        %v588 = vld [vmem:[%s576 + $0x2c] sm:$0xf]
        %v589 = vld [vmem:[%s576 + $0x30] sm:$0xf]
        %v590 = vld [vmem:[%s576 + $0x34] sm:$0xf]
        %v591 = vld [vmem:[%s576 + $0x38] sm:$0xf]
        %v592 = vld [vmem:[%s576 + $0x3c] sm:$0xf]
        %v593 = vunpack.c.l.b16 %v541
        %v594 = vunpack.c.l.b16 %v551
        %v595 = vunpack.c.l.b16 %v565
        %v596 = vunpack.c.l.b16 %v575
        %v597 = vpack.c.b16 %v594, %v593
        %v598 = vpack.c.b16 %v596, %v595
        %v617 = vunpack.c.l.b16 %v577
        %v618 = vunpack.c.l.b16 %v578
        %v619 = vunpack.c.l.b16 %v579
        %v620 = vunpack.c.l.b16 %v580
        %v621 = vunpack.c.l.b16 %v581
        %v622 = vunpack.c.l.b16 %v582
        %v623 = vunpack.c.l.b16 %v583
        %v624 = vunpack.c.l.b16 %v584
        %v625 = vunpack.c.l.b16 %v585
        %v626 = vunpack.c.l.b16 %v586
        %v627 = vunpack.c.l.b16 %v587
        %v628 = vunpack.c.l.b16 %v588
        %v629 = vunpack.c.l.b16 %v589
        %v630 = vunpack.c.l.b16 %v590
        %v631 = vunpack.c.l.b16 %v591
        %v632 = vunpack.c.l.b16 %v592
        %v633 = vpack.c.b16 %v618, %v617
        %v634 = vpack.c.b16 %v620, %v619
        %v635 = vpack.c.b16 %v622, %v621
        %v636 = vpack.c.b16 %v624, %v623
        %v637 = vpack.c.b16 %v626, %v625
        %v638 = vpack.c.b16 %v628, %v627
        %v639 = vpack.c.b16 %v630, %v629
        %v640 = vpack.c.b16 %v632, %v631
        %649 = vmatpush.bf16.msra.mxu0 %v640
        %650 = vmatpush.bf16.msra.mxu0 %v639
        %651 = vmatpush.bf16.msra.mxu0 %v638
        %652 = vmatpush.bf16.msra.mxu0 %v637
        %653 = vmatpush.bf16.msra.mxu0 %v636
        %654 = vmatpush.bf16.msra.mxu0 %v635
        %655 = vmatpush.bf16.msra.mxu0 %v634
        %656 = vmatpush.bf16.msra.mxu0 %v633
        %657 = vmatmul.bf16.gmra.mxu0 %v597
        %v658 = vpop.f32.mrf.mxu0
        %v659 = vadd.f32 0.0, %v658
        %v660 = vpop.f32.mrf.mxu0
        %v661 = vadd.f32 0.0, %v660
        %662 = vmatmul.bf16.gmra.mxu0 %v598
        %v663 = vpop.f32.mrf.mxu0
        %v664 = vadd.f32 0.0, %v663
        %v665 = vpop.f32.mrf.mxu0
        %v666 = vadd.f32 0.0, %v665
        %667 = vdwg.mxu0
        %v672 = vunpack.c.l.b16 %v503
        %v673 = vunpack.c.l.b16 %v504
        %v674 = vunpack.c.l.b16 %v506
        %v675 = vunpack.c.l.b16 %v507
        %v676 = vpack.c.b16 %v673, %v672
        %v677 = vpack.c.b16 %v675, %v674
        %v696 = vunpack.c.l.b16 %v509
        %v697 = vunpack.c.l.b16 %v510
        %v698 = vunpack.c.l.b16 %v511
        %v699 = vunpack.c.l.b16 %v512
        %v700 = vunpack.c.l.b16 %v513
        %v701 = vunpack.c.l.b16 %v514
        %v702 = vunpack.c.l.b16 %v515
        %v703 = vunpack.c.l.b16 %v516
        %v704 = vunpack.c.l.b16 %v517
        %v705 = vunpack.c.l.b16 %v518
        %v706 = vunpack.c.l.b16 %v519
        %v707 = vunpack.c.l.b16 %v520
        %v708 = vunpack.c.l.b16 %v521
        %v709 = vunpack.c.l.b16 %v522
        %v710 = vunpack.c.l.b16 %v523
        %v711 = vunpack.c.l.b16 %v524
        %v712 = vpack.c.b16 %v697, %v696
        %v713 = vpack.c.b16 %v699, %v698
        %v714 = vpack.c.b16 %v701, %v700
        %v715 = vpack.c.b16 %v703, %v702
        %v716 = vpack.c.b16 %v705, %v704
        %v717 = vpack.c.b16 %v707, %v706
        %v718 = vpack.c.b16 %v709, %v708
        %v719 = vpack.c.b16 %v711, %v710
        %728 = vmatpush.bf16.msra.mxu0 %v719
        %729 = vmatpush.bf16.msra.mxu0 %v718
        %730 = vmatpush.bf16.msra.mxu0 %v717
        %731 = vmatpush.bf16.msra.mxu0 %v716
        %732 = vmatpush.bf16.msra.mxu0 %v715
        %733 = vmatpush.bf16.msra.mxu0 %v714
        %734 = vmatpush.bf16.msra.mxu0 %v713
        %735 = vmatpush.bf16.msra.mxu0 %v712
        %736 = vmatmul.bf16.gmra.mxu0 %v676
        %v737 = vpop.f32.mrf.mxu0
        %v738 = vadd.f32 %v659, %v737
        %v739 = vpop.f32.mrf.mxu0
        %v740 = vadd.f32 %v661, %v739
        %741 = vmatmul.bf16.gmra.mxu0 %v677
        %v742 = vpop.f32.mrf.mxu0
        %v743 = vadd.f32 %v664, %v742
        %v744 = vpop.f32.mrf.mxu0
        %v745 = vadd.f32 %v666, %v744
        %746 = vdwg.mxu0
        %vm749 = vcmask 1042432
        %vm750 = vcmask 1046532
        %vm751 = vmor %vm749, %vm750
        %v752 = vrot.slane %v503, 5
        %v753 = vrot.slane %v752, 4
        %v754 = vrot.slane %v504, 5
        %v755 = vsel %vm751, %v753, %v754
        %v756 = vrot.slane %v754, 4
        %v757 = vrot.slane %v505, 5
        %v758 = vsel %vm751, %v756, %v757
        %v759 = vrot.slane %v506, 5
        %v760 = vrot.slane %v759, 4
        %v761 = vrot.slane %v507, 5
        %v762 = vsel %vm751, %v760, %v761
        %v763 = vrot.slane %v761, 4
        %v764 = vrot.slane %v508, 5
        %v765 = vsel %vm751, %v763, %v764
        %s766 = scalar_lea.vmem %s3, 128
        %v767 = vld [vmem:[%s766] sm:$0xf]
        %v768 = vld [vmem:[%s766 + $0x4] sm:$0xf]
        %v769 = vld [vmem:[%s766 + $0x8] sm:$0xf]
        %v770 = vld [vmem:[%s766 + $0xc] sm:$0xf]
        %v771 = vld [vmem:[%s766 + $0x10] sm:$0xf]
        %v772 = vld [vmem:[%s766 + $0x14] sm:$0xf]
        %v773 = vld [vmem:[%s766 + $0x18] sm:$0xf]
        %v774 = vld [vmem:[%s766 + $0x1c] sm:$0xf]
        %v775 = vld [vmem:[%s766 + $0x20] sm:$0xf]
        %v776 = vld [vmem:[%s766 + $0x24] sm:$0xf]
        %v777 = vld [vmem:[%s766 + $0x28] sm:$0xf]
        %v778 = vld [vmem:[%s766 + $0x2c] sm:$0xf]
        %v779 = vld [vmem:[%s766 + $0x30] sm:$0xf]
        %v780 = vld [vmem:[%s766 + $0x34] sm:$0xf]
        %v781 = vld [vmem:[%s766 + $0x38] sm:$0xf]
        %v782 = vld [vmem:[%s766 + $0x3c] sm:$0xf]
        %v783 = vunpack.c.l.b16 %v755
        %v784 = vunpack.c.l.b16 %v758
        %v785 = vunpack.c.l.b16 %v762
        %v786 = vunpack.c.l.b16 %v765
        %v787 = vpack.c.b16 %v784, %v783
        %v788 = vpack.c.b16 %v786, %v785
        %v807 = vunpack.c.l.b16 %v767
        %v808 = vunpack.c.l.b16 %v768
        %v809 = vunpack.c.l.b16 %v769
        %v810 = vunpack.c.l.b16 %v770
        %v811 = vunpack.c.l.b16 %v771
        %v812 = vunpack.c.l.b16 %v772
        %v813 = vunpack.c.l.b16 %v773
        %v814 = vunpack.c.l.b16 %v774
        %v815 = vunpack.c.l.b16 %v775
        %v816 = vunpack.c.l.b16 %v776
        %v817 = vunpack.c.l.b16 %v777
        %v818 = vunpack.c.l.b16 %v778
        %v819 = vunpack.c.l.b16 %v779
        %v820 = vunpack.c.l.b16 %v780
        %v821 = vunpack.c.l.b16 %v781
        %v822 = vunpack.c.l.b16 %v782
        %v823 = vpack.c.b16 %v808, %v807
        %v824 = vpack.c.b16 %v810, %v809
        %v825 = vpack.c.b16 %v812, %v811
        %v826 = vpack.c.b16 %v814, %v813
        %v827 = vpack.c.b16 %v816, %v815
        %v828 = vpack.c.b16 %v818, %v817
        %v829 = vpack.c.b16 %v820, %v819
        %v830 = vpack.c.b16 %v822, %v821
        %839 = vmatpush.bf16.msra.mxu0 %v830
        %840 = vmatpush.bf16.msra.mxu0 %v829
        %841 = vmatpush.bf16.msra.mxu0 %v828
        %842 = vmatpush.bf16.msra.mxu0 %v827
        %843 = vmatpush.bf16.msra.mxu0 %v826
        %844 = vmatpush.bf16.msra.mxu0 %v825
        %845 = vmatpush.bf16.msra.mxu0 %v824
        %846 = vmatpush.bf16.msra.mxu0 %v823
        %847 = vmatmul.bf16.gmra.mxu0 %v787
        %v848 = vpop.f32.mrf.mxu0
        %v849 = vadd.f32 0.0, %v848
        %v850 = vpop.f32.mrf.mxu0
        %v851 = vadd.f32 0.0, %v850
        %852 = vmatmul.bf16.gmra.mxu0 %v788
        %v853 = vpop.f32.mrf.mxu0
        %v854 = vadd.f32 0.0, %v853
        %v855 = vpop.f32.mrf.mxu0
        %v856 = vadd.f32 0.0, %v855
        %857 = vdwg.mxu0
        %v858 = vadd.f32 %v738, %v849
        %v859 = vadd.f32 %v740, %v851
        %v860 = vadd.f32 %v743, %v854
        %v861 = vadd.f32 %v745, %v856
        %v862 = vld [vmem:[%s446] sm:$0xf]
        %v863 = vld [vmem:[%s446 + $0x4] sm:$0xf]
        %v864 = vld [vmem:[%s446 + $0x8] sm:$0x1]
        %v865 = vld [vmem:[%s446 + $0xc] sm:$0xf]
        %v866 = vld [vmem:[%s446 + $0x10] sm:$0xf]
        %v867 = vld [vmem:[%s446 + $0x14] sm:$0x1]
        %s868 = scalar_lea.vmem %s3, 192
        %v869 = vld [vmem:[%s868] sm:$0xf]
        %v870 = vld [vmem:[%s868 + $0x4] sm:$0xf]
        %v871 = vld [vmem:[%s868 + $0x8] sm:$0xf]
        %v872 = vld [vmem:[%s868 + $0xc] sm:$0xf]
        %v873 = vld [vmem:[%s868 + $0x10] sm:$0xf]
        %v874 = vld [vmem:[%s868 + $0x14] sm:$0xf]
        %v875 = vld [vmem:[%s868 + $0x18] sm:$0xf]
        %v876 = vld [vmem:[%s868 + $0x1c] sm:$0xf]
        %v877 = vld [vmem:[%s868 + $0x20] sm:$0xf]
        %v878 = vld [vmem:[%s868 + $0x24] sm:$0xf]
        %v879 = vld [vmem:[%s868 + $0x28] sm:$0xf]
        %v880 = vld [vmem:[%s868 + $0x2c] sm:$0xf]
        %v881 = vld [vmem:[%s868 + $0x30] sm:$0xf]
        %v882 = vld [vmem:[%s868 + $0x34] sm:$0xf]
        %v883 = vld [vmem:[%s868 + $0x38] sm:$0xf]
        %v884 = vld [vmem:[%s868 + $0x3c] sm:$0xf]
        %v889 = vunpack.c.l.b16 %v862
        %v890 = vunpack.c.l.b16 %v863
        %v891 = vunpack.c.l.b16 %v865
        %v892 = vunpack.c.l.b16 %v866
        %v893 = vpack.c.b16 %v890, %v889
        %v894 = vpack.c.b16 %v892, %v891
        %v913 = vunpack.c.l.b16 %v869
        %v914 = vunpack.c.l.b16 %v870
        %v915 = vunpack.c.l.b16 %v871
        %v916 = vunpack.c.l.b16 %v872
        %v917 = vunpack.c.l.b16 %v873
        %v918 = vunpack.c.l.b16 %v874
        %v919 = vunpack.c.l.b16 %v875
        %v920 = vunpack.c.l.b16 %v876
        %v921 = vunpack.c.l.b16 %v877
        %v922 = vunpack.c.l.b16 %v878
        %v923 = vunpack.c.l.b16 %v879
        %v924 = vunpack.c.l.b16 %v880
        %v925 = vunpack.c.l.b16 %v881
        %v926 = vunpack.c.l.b16 %v882
        %v927 = vunpack.c.l.b16 %v883
        %v928 = vunpack.c.l.b16 %v884
        %v929 = vpack.c.b16 %v914, %v913
        %v930 = vpack.c.b16 %v916, %v915
        %v931 = vpack.c.b16 %v918, %v917
        %v932 = vpack.c.b16 %v920, %v919
        %v933 = vpack.c.b16 %v922, %v921
        %v934 = vpack.c.b16 %v924, %v923
        %v935 = vpack.c.b16 %v926, %v925
        %v936 = vpack.c.b16 %v928, %v927
        %945 = vmatpush.bf16.msra.mxu0 %v936
        %946 = vmatpush.bf16.msra.mxu0 %v935
        %947 = vmatpush.bf16.msra.mxu0 %v934
        %948 = vmatpush.bf16.msra.mxu0 %v933
        %949 = vmatpush.bf16.msra.mxu0 %v932
        %950 = vmatpush.bf16.msra.mxu0 %v931
        %951 = vmatpush.bf16.msra.mxu0 %v930
        %952 = vmatpush.bf16.msra.mxu0 %v929
        %953 = vmatmul.bf16.gmra.mxu0 %v893
        %v954 = vpop.f32.mrf.mxu0
        %v955 = vadd.f32 0.0, %v954
        %v956 = vpop.f32.mrf.mxu0
        %v957 = vadd.f32 0.0, %v956
        %958 = vmatmul.bf16.gmra.mxu0 %v894
        %v959 = vpop.f32.mrf.mxu0
        %v960 = vadd.f32 0.0, %v959
        %v961 = vpop.f32.mrf.mxu0
        %v962 = vadd.f32 0.0, %v961
        %963 = vdwg.mxu0
        %v964 = vadd.f32 %v858, %v955
        %v965 = vadd.f32 %v859, %v957
        %v966 = vadd.f32 %v860, %v960
        %v967 = vadd.f32 %v861, %v962
        %v969 = vshrl.u32 %v862, 16
        %v971 = vrot.slane %v969, 4
        %v972 = vshll.u32 %v862, 16
        %v974 = vrot.slane %v972, 5
        %v975 = vor.u32 %v971, %v974
        %v976 = vrot.slane %v975, 4
        %v978 = vshll.u32 %v863, 16
        %v980 = vrot.slane %v978, 5
        %v981 = vsel %vm527, %v976, %v980
        %v982 = vshrl.u32 %v863, 16
        %v984 = vrot.slane %v982, 4
        %v985 = vor.u32 %v984, %v980
        %v986 = vrot.slane %v985, 4
        %v988 = vshll.u32 %v864, 16
        %v990 = vrot.slane %v988, 5
        %v991 = vsel %vm527, %v986, %v990
        %v993 = vshrl.u32 %v865, 16
        %v995 = vrot.slane %v993, 4
        %v996 = vshll.u32 %v865, 16
        %v998 = vrot.slane %v996, 5
        %v999 = vor.u32 %v995, %v998
        %v1000 = vrot.slane %v999, 4
        %v1002 = vshll.u32 %v866, 16
        %v1004 = vrot.slane %v1002, 5
        %v1005 = vsel %vm527, %v1000, %v1004
        %v1006 = vshrl.u32 %v866, 16
        %v1008 = vrot.slane %v1006, 4
        %v1009 = vor.u32 %v1008, %v1004
        %v1010 = vrot.slane %v1009, 4
        %v1012 = vshll.u32 %v867, 16
        %v1014 = vrot.slane %v1012, 5
        %v1015 = vsel %vm527, %v1010, %v1014
        %s1016 = scalar_lea.vmem %s3, 256
        %v1017 = vld [vmem:[%s1016] sm:$0xf]
        %v1018 = vld [vmem:[%s1016 + $0x4] sm:$0xf]
        %v1019 = vld [vmem:[%s1016 + $0x8] sm:$0xf]
        %v1020 = vld [vmem:[%s1016 + $0xc] sm:$0xf]
        %v1021 = vld [vmem:[%s1016 + $0x10] sm:$0xf]
        %v1022 = vld [vmem:[%s1016 + $0x14] sm:$0xf]
        %v1023 = vld [vmem:[%s1016 + $0x18] sm:$0xf]
        %v1024 = vld [vmem:[%s1016 + $0x1c] sm:$0xf]
        %v1025 = vld [vmem:[%s1016 + $0x20] sm:$0xf]
        %v1026 = vld [vmem:[%s1016 + $0x24] sm:$0xf]
        %v1027 = vld [vmem:[%s1016 + $0x28] sm:$0xf]
        %v1028 = vld [vmem:[%s1016 + $0x2c] sm:$0xf]
        %v1029 = vld [vmem:[%s1016 + $0x30] sm:$0xf]
        %v1030 = vld [vmem:[%s1016 + $0x34] sm:$0xf]
        %v1031 = vld [vmem:[%s1016 + $0x38] sm:$0xf]
        %v1032 = vld [vmem:[%s1016 + $0x3c] sm:$0xf]
        %v1033 = vunpack.c.l.b16 %v981
        %v1034 = vunpack.c.l.b16 %v991
        %v1035 = vunpack.c.l.b16 %v1005
        %v1036 = vunpack.c.l.b16 %v1015
        %v1037 = vpack.c.b16 %v1034, %v1033
        %v1038 = vpack.c.b16 %v1036, %v1035
        %v1057 = vunpack.c.l.b16 %v1017
        %v1058 = vunpack.c.l.b16 %v1018
        %v1059 = vunpack.c.l.b16 %v1019
        %v1060 = vunpack.c.l.b16 %v1020
        %v1061 = vunpack.c.l.b16 %v1021
        %v1062 = vunpack.c.l.b16 %v1022
        %v1063 = vunpack.c.l.b16 %v1023
        %v1064 = vunpack.c.l.b16 %v1024
        %v1065 = vunpack.c.l.b16 %v1025
        %v1066 = vunpack.c.l.b16 %v1026
        %v1067 = vunpack.c.l.b16 %v1027
        %v1068 = vunpack.c.l.b16 %v1028
        %v1069 = vunpack.c.l.b16 %v1029
        %v1070 = vunpack.c.l.b16 %v1030
        %v1071 = vunpack.c.l.b16 %v1031
        %v1072 = vunpack.c.l.b16 %v1032
        %v1073 = vpack.c.b16 %v1058, %v1057
        %v1074 = vpack.c.b16 %v1060, %v1059
        %v1075 = vpack.c.b16 %v1062, %v1061
        %v1076 = vpack.c.b16 %v1064, %v1063
        %v1077 = vpack.c.b16 %v1066, %v1065
        %v1078 = vpack.c.b16 %v1068, %v1067
        %v1079 = vpack.c.b16 %v1070, %v1069
        %v1080 = vpack.c.b16 %v1072, %v1071
        %1089 = vmatpush.bf16.msra.mxu0 %v1080
        %1090 = vmatpush.bf16.msra.mxu0 %v1079
        %1091 = vmatpush.bf16.msra.mxu0 %v1078
        %1092 = vmatpush.bf16.msra.mxu0 %v1077
        %1093 = vmatpush.bf16.msra.mxu0 %v1076
        %1094 = vmatpush.bf16.msra.mxu0 %v1075
        %1095 = vmatpush.bf16.msra.mxu0 %v1074
        %1096 = vmatpush.bf16.msra.mxu0 %v1073
        %1097 = vmatmul.bf16.gmra.mxu0 %v1037
        %v1098 = vpop.f32.mrf.mxu0
        %v1099 = vadd.f32 0.0, %v1098
        %v1100 = vpop.f32.mrf.mxu0
        %v1101 = vadd.f32 0.0, %v1100
        %1102 = vmatmul.bf16.gmra.mxu0 %v1038
        %v1103 = vpop.f32.mrf.mxu0
        %v1104 = vadd.f32 0.0, %v1103
        %v1105 = vpop.f32.mrf.mxu0
        %v1106 = vadd.f32 0.0, %v1105
        %1107 = vdwg.mxu0
        %v1108 = vadd.f32 %v964, %v1099
        %v1109 = vadd.f32 %v965, %v1101
        %v1110 = vadd.f32 %v966, %v1104
        %v1111 = vadd.f32 %v967, %v1106
        %v1114 = vrot.slane %v862, 5
        %v1115 = vrot.slane %v1114, 4
        %v1116 = vrot.slane %v863, 5
        %v1117 = vsel %vm751, %v1115, %v1116
        %v1118 = vrot.slane %v1116, 4
        %v1119 = vrot.slane %v864, 5
        %v1120 = vsel %vm751, %v1118, %v1119
        %v1121 = vrot.slane %v865, 5
        %v1122 = vrot.slane %v1121, 4
        %v1123 = vrot.slane %v866, 5
        %v1124 = vsel %vm751, %v1122, %v1123
        %v1125 = vrot.slane %v1123, 4
        %v1126 = vrot.slane %v867, 5
        %v1127 = vsel %vm751, %v1125, %v1126
        %s1128 = scalar_lea.vmem %s3, 320
        %v1129 = vld [vmem:[%s1128] sm:$0xf]
        %v1130 = vld [vmem:[%s1128 + $0x4] sm:$0xf]
        %v1131 = vld [vmem:[%s1128 + $0x8] sm:$0xf]
        %v1132 = vld [vmem:[%s1128 + $0xc] sm:$0xf]
        %v1133 = vld [vmem:[%s1128 + $0x10] sm:$0xf]
        %v1134 = vld [vmem:[%s1128 + $0x14] sm:$0xf]
        %v1135 = vld [vmem:[%s1128 + $0x18] sm:$0xf]
        %v1136 = vld [vmem:[%s1128 + $0x1c] sm:$0xf]
        %v1137 = vld [vmem:[%s1128 + $0x20] sm:$0xf]
        %v1138 = vld [vmem:[%s1128 + $0x24] sm:$0xf]
        %v1139 = vld [vmem:[%s1128 + $0x28] sm:$0xf]
        %v1140 = vld [vmem:[%s1128 + $0x2c] sm:$0xf]
        %v1141 = vld [vmem:[%s1128 + $0x30] sm:$0xf]
        %v1142 = vld [vmem:[%s1128 + $0x34] sm:$0xf]
        %v1143 = vld [vmem:[%s1128 + $0x38] sm:$0xf]
        %v1144 = vld [vmem:[%s1128 + $0x3c] sm:$0xf]
        %v1145 = vunpack.c.l.b16 %v1117
        %v1146 = vunpack.c.l.b16 %v1120
        %v1147 = vunpack.c.l.b16 %v1124
        %v1148 = vunpack.c.l.b16 %v1127
        %v1149 = vpack.c.b16 %v1146, %v1145
        %v1150 = vpack.c.b16 %v1148, %v1147
        %v1169 = vunpack.c.l.b16 %v1129
        %v1170 = vunpack.c.l.b16 %v1130
        %v1171 = vunpack.c.l.b16 %v1131
        %v1172 = vunpack.c.l.b16 %v1132
        %v1173 = vunpack.c.l.b16 %v1133
        %v1174 = vunpack.c.l.b16 %v1134
        %v1175 = vunpack.c.l.b16 %v1135
        %v1176 = vunpack.c.l.b16 %v1136
        %v1177 = vunpack.c.l.b16 %v1137
        %v1178 = vunpack.c.l.b16 %v1138
        %v1179 = vunpack.c.l.b16 %v1139
        %v1180 = vunpack.c.l.b16 %v1140
        %v1181 = vunpack.c.l.b16 %v1141
        %v1182 = vunpack.c.l.b16 %v1142
        %v1183 = vunpack.c.l.b16 %v1143
        %v1184 = vunpack.c.l.b16 %v1144
        %v1185 = vpack.c.b16 %v1170, %v1169
        %v1186 = vpack.c.b16 %v1172, %v1171
        %v1187 = vpack.c.b16 %v1174, %v1173
        %v1188 = vpack.c.b16 %v1176, %v1175
        %v1189 = vpack.c.b16 %v1178, %v1177
        %v1190 = vpack.c.b16 %v1180, %v1179
        %v1191 = vpack.c.b16 %v1182, %v1181
        %v1192 = vpack.c.b16 %v1184, %v1183
        %1201 = vmatpush.bf16.msra.mxu0 %v1192
        %1202 = vmatpush.bf16.msra.mxu0 %v1191
        %1203 = vmatpush.bf16.msra.mxu0 %v1190
        %1204 = vmatpush.bf16.msra.mxu0 %v1189
        %1205 = vmatpush.bf16.msra.mxu0 %v1188
        %1206 = vmatpush.bf16.msra.mxu0 %v1187
        %1207 = vmatpush.bf16.msra.mxu0 %v1186
        %1208 = vmatpush.bf16.msra.mxu0 %v1185
        %1209 = vmatmul.bf16.gmra.mxu0 %v1149
        %v1210 = vpop.f32.mrf.mxu0
        %v1211 = vadd.f32 0.0, %v1210
        %v1212 = vpop.f32.mrf.mxu0
        %v1213 = vadd.f32 0.0, %v1212
        %1214 = vmatmul.bf16.gmra.mxu0 %v1150
        %v1215 = vpop.f32.mrf.mxu0
        %v1216 = vadd.f32 0.0, %v1215
        %v1217 = vpop.f32.mrf.mxu0
        %v1218 = vadd.f32 0.0, %v1217
        %1219 = vdwg.mxu0
        %v1220 = vadd.f32 %v1108, %v1211
        %v1221 = vadd.f32 %v1109, %v1213
        %v1222 = vadd.f32 %v1110, %v1216
        %v1223 = vadd.f32 %v1111, %v1218
        %v1224 = vld [vmem:[%s453] sm:$0xf]
        %v1225 = vld [vmem:[%s453 + $0x4] sm:$0xf]
        %v1226 = vld [vmem:[%s453 + $0x8] sm:$0x1]
        %v1227 = vld [vmem:[%s453 + $0xc] sm:$0xf]
        %v1228 = vld [vmem:[%s453 + $0x10] sm:$0xf]
        %v1229 = vld [vmem:[%s453 + $0x14] sm:$0x1]
        %s1230 = scalar_lea.vmem %s3, 384
        %v1231 = vld [vmem:[%s1230] sm:$0xf]
        %v1232 = vld [vmem:[%s1230 + $0x4] sm:$0xf]
        %v1233 = vld [vmem:[%s1230 + $0x8] sm:$0xf]
        %v1234 = vld [vmem:[%s1230 + $0xc] sm:$0xf]
        %v1235 = vld [vmem:[%s1230 + $0x10] sm:$0xf]
        %v1236 = vld [vmem:[%s1230 + $0x14] sm:$0xf]
        %v1237 = vld [vmem:[%s1230 + $0x18] sm:$0xf]
        %v1238 = vld [vmem:[%s1230 + $0x1c] sm:$0xf]
        %v1239 = vld [vmem:[%s1230 + $0x20] sm:$0xf]
        %v1240 = vld [vmem:[%s1230 + $0x24] sm:$0xf]
        %v1241 = vld [vmem:[%s1230 + $0x28] sm:$0xf]
        %v1242 = vld [vmem:[%s1230 + $0x2c] sm:$0xf]
        %v1243 = vld [vmem:[%s1230 + $0x30] sm:$0xf]
        %v1244 = vld [vmem:[%s1230 + $0x34] sm:$0xf]
        %v1245 = vld [vmem:[%s1230 + $0x38] sm:$0xf]
        %v1246 = vld [vmem:[%s1230 + $0x3c] sm:$0xf]
        %v1251 = vunpack.c.l.b16 %v1224
        %v1252 = vunpack.c.l.b16 %v1225
        %v1253 = vunpack.c.l.b16 %v1227
        %v1254 = vunpack.c.l.b16 %v1228
        %v1255 = vpack.c.b16 %v1252, %v1251
        %v1256 = vpack.c.b16 %v1254, %v1253
        %v1275 = vunpack.c.l.b16 %v1231
        %v1276 = vunpack.c.l.b16 %v1232
        %v1277 = vunpack.c.l.b16 %v1233
        %v1278 = vunpack.c.l.b16 %v1234
        %v1279 = vunpack.c.l.b16 %v1235
        %v1280 = vunpack.c.l.b16 %v1236
        %v1281 = vunpack.c.l.b16 %v1237
        %v1282 = vunpack.c.l.b16 %v1238
        %v1283 = vunpack.c.l.b16 %v1239
        %v1284 = vunpack.c.l.b16 %v1240
        %v1285 = vunpack.c.l.b16 %v1241
        %v1286 = vunpack.c.l.b16 %v1242
        %v1287 = vunpack.c.l.b16 %v1243
        %v1288 = vunpack.c.l.b16 %v1244
        %v1289 = vunpack.c.l.b16 %v1245
        %v1290 = vunpack.c.l.b16 %v1246
        %v1291 = vpack.c.b16 %v1276, %v1275
        %v1292 = vpack.c.b16 %v1278, %v1277
        %v1293 = vpack.c.b16 %v1280, %v1279
        %v1294 = vpack.c.b16 %v1282, %v1281
        %v1295 = vpack.c.b16 %v1284, %v1283
        %v1296 = vpack.c.b16 %v1286, %v1285
        %v1297 = vpack.c.b16 %v1288, %v1287
        %v1298 = vpack.c.b16 %v1290, %v1289
        %1307 = vmatpush.bf16.msra.mxu0 %v1298
        %1308 = vmatpush.bf16.msra.mxu0 %v1297
        %1309 = vmatpush.bf16.msra.mxu0 %v1296
        %1310 = vmatpush.bf16.msra.mxu0 %v1295
        %1311 = vmatpush.bf16.msra.mxu0 %v1294
        %1312 = vmatpush.bf16.msra.mxu0 %v1293
        %1313 = vmatpush.bf16.msra.mxu0 %v1292
        %1314 = vmatpush.bf16.msra.mxu0 %v1291
        %1315 = vmatmul.bf16.gmra.mxu0 %v1255
        %v1316 = vpop.f32.mrf.mxu0
        %v1317 = vadd.f32 0.0, %v1316
        %v1318 = vpop.f32.mrf.mxu0
        %v1319 = vadd.f32 0.0, %v1318
        %1320 = vmatmul.bf16.gmra.mxu0 %v1256
        %v1321 = vpop.f32.mrf.mxu0
        %v1322 = vadd.f32 0.0, %v1321
        %v1323 = vpop.f32.mrf.mxu0
        %v1324 = vadd.f32 0.0, %v1323
        %1325 = vdwg.mxu0
        %v1326 = vadd.f32 %v1220, %v1317
        %v1327 = vadd.f32 %v1221, %v1319
        %v1328 = vadd.f32 %v1222, %v1322
        %v1329 = vadd.f32 %v1223, %v1324
        %v1331 = vshrl.u32 %v1224, 16
        %v1333 = vrot.slane %v1331, 4
        %v1334 = vshll.u32 %v1224, 16
        %v1336 = vrot.slane %v1334, 5
        %v1337 = vor.u32 %v1333, %v1336
        %v1338 = vrot.slane %v1337, 4
        %v1340 = vshll.u32 %v1225, 16
        %v1342 = vrot.slane %v1340, 5
        %v1343 = vsel %vm527, %v1338, %v1342
        %v1344 = vshrl.u32 %v1225, 16
        %v1346 = vrot.slane %v1344, 4
        %v1347 = vor.u32 %v1346, %v1342
        %v1348 = vrot.slane %v1347, 4
        %v1350 = vshll.u32 %v1226, 16
        %v1352 = vrot.slane %v1350, 5
        %v1353 = vsel %vm527, %v1348, %v1352
        %v1355 = vshrl.u32 %v1227, 16
        %v1357 = vrot.slane %v1355, 4
        %v1358 = vshll.u32 %v1227, 16
        %v1360 = vrot.slane %v1358, 5
        %v1361 = vor.u32 %v1357, %v1360
        %v1362 = vrot.slane %v1361, 4
        %v1364 = vshll.u32 %v1228, 16
        %v1366 = vrot.slane %v1364, 5
        %v1367 = vsel %vm527, %v1362, %v1366
        %v1368 = vshrl.u32 %v1228, 16
        %v1370 = vrot.slane %v1368, 4
        %v1371 = vor.u32 %v1370, %v1366
        %v1372 = vrot.slane %v1371, 4
        %v1374 = vshll.u32 %v1229, 16
        %v1376 = vrot.slane %v1374, 5
        %v1377 = vsel %vm527, %v1372, %v1376
        %s1378 = scalar_lea.vmem %s3, 448
        %v1379 = vld [vmem:[%s1378] sm:$0xf]
        %v1380 = vld [vmem:[%s1378 + $0x4] sm:$0xf]
        %v1381 = vld [vmem:[%s1378 + $0x8] sm:$0xf]
        %v1382 = vld [vmem:[%s1378 + $0xc] sm:$0xf]
        %v1383 = vld [vmem:[%s1378 + $0x10] sm:$0xf]
        %v1384 = vld [vmem:[%s1378 + $0x14] sm:$0xf]
        %v1385 = vld [vmem:[%s1378 + $0x18] sm:$0xf]
        %v1386 = vld [vmem:[%s1378 + $0x1c] sm:$0xf]
        %v1387 = vld [vmem:[%s1378 + $0x20] sm:$0xf]
        %v1388 = vld [vmem:[%s1378 + $0x24] sm:$0xf]
        %v1389 = vld [vmem:[%s1378 + $0x28] sm:$0xf]
        %v1390 = vld [vmem:[%s1378 + $0x2c] sm:$0xf]
        %v1391 = vld [vmem:[%s1378 + $0x30] sm:$0xf]
        %v1392 = vld [vmem:[%s1378 + $0x34] sm:$0xf]
        %v1393 = vld [vmem:[%s1378 + $0x38] sm:$0xf]
        %v1394 = vld [vmem:[%s1378 + $0x3c] sm:$0xf]
        %v1395 = vunpack.c.l.b16 %v1343
        %v1396 = vunpack.c.l.b16 %v1353
        %v1397 = vunpack.c.l.b16 %v1367
        %v1398 = vunpack.c.l.b16 %v1377
        %v1399 = vpack.c.b16 %v1396, %v1395
        %v1400 = vpack.c.b16 %v1398, %v1397
        %v1419 = vunpack.c.l.b16 %v1379
        %v1420 = vunpack.c.l.b16 %v1380
        %v1421 = vunpack.c.l.b16 %v1381
        %v1422 = vunpack.c.l.b16 %v1382
        %v1423 = vunpack.c.l.b16 %v1383
        %v1424 = vunpack.c.l.b16 %v1384
        %v1425 = vunpack.c.l.b16 %v1385
        %v1426 = vunpack.c.l.b16 %v1386
        %v1427 = vunpack.c.l.b16 %v1387
        %v1428 = vunpack.c.l.b16 %v1388
        %v1429 = vunpack.c.l.b16 %v1389
        %v1430 = vunpack.c.l.b16 %v1390
        %v1431 = vunpack.c.l.b16 %v1391
        %v1432 = vunpack.c.l.b16 %v1392
        %v1433 = vunpack.c.l.b16 %v1393
        %v1434 = vunpack.c.l.b16 %v1394
        %v1435 = vpack.c.b16 %v1420, %v1419
        %v1436 = vpack.c.b16 %v1422, %v1421
        %v1437 = vpack.c.b16 %v1424, %v1423
        %v1438 = vpack.c.b16 %v1426, %v1425
        %v1439 = vpack.c.b16 %v1428, %v1427
        %v1440 = vpack.c.b16 %v1430, %v1429
        %v1441 = vpack.c.b16 %v1432, %v1431
        %v1442 = vpack.c.b16 %v1434, %v1433
        %1451 = vmatpush.bf16.msra.mxu0 %v1442
        %1452 = vmatpush.bf16.msra.mxu0 %v1441
        %1453 = vmatpush.bf16.msra.mxu0 %v1440
        %1454 = vmatpush.bf16.msra.mxu0 %v1439
        %1455 = vmatpush.bf16.msra.mxu0 %v1438
        %1456 = vmatpush.bf16.msra.mxu0 %v1437
        %1457 = vmatpush.bf16.msra.mxu0 %v1436
        %1458 = vmatpush.bf16.msra.mxu0 %v1435
        %1459 = vmatmul.bf16.gmra.mxu0 %v1399
        %v1460 = vpop.f32.mrf.mxu0
        %v1461 = vadd.f32 0.0, %v1460
        %v1462 = vpop.f32.mrf.mxu0
        %v1463 = vadd.f32 0.0, %v1462
        %1464 = vmatmul.bf16.gmra.mxu0 %v1400
        %v1465 = vpop.f32.mrf.mxu0
        %v1466 = vadd.f32 0.0, %v1465
        %v1467 = vpop.f32.mrf.mxu0
        %v1468 = vadd.f32 0.0, %v1467
        %1469 = vdwg.mxu0
        %v1470 = vadd.f32 %v1326, %v1461
        %v1471 = vadd.f32 %v1327, %v1463
        %v1472 = vadd.f32 %v1328, %v1466
        %v1473 = vadd.f32 %v1329, %v1468
        %v1476 = vrot.slane %v1224, 5
        %v1477 = vrot.slane %v1476, 4
        %v1478 = vrot.slane %v1225, 5
        %v1479 = vsel %vm751, %v1477, %v1478
        %v1480 = vrot.slane %v1478, 4
        %v1481 = vrot.slane %v1226, 5
        %v1482 = vsel %vm751, %v1480, %v1481
        %v1483 = vrot.slane %v1227, 5
        %v1484 = vrot.slane %v1483, 4
        %v1485 = vrot.slane %v1228, 5
        %v1486 = vsel %vm751, %v1484, %v1485
        %v1487 = vrot.slane %v1485, 4
        %v1488 = vrot.slane %v1229, 5
        %v1489 = vsel %vm751, %v1487, %v1488
        %s1490 = scalar_lea.vmem %s3, 512
        %v1491 = vld [vmem:[%s1490] sm:$0xf]
        %v1492 = vld [vmem:[%s1490 + $0x4] sm:$0xf]
        %v1493 = vld [vmem:[%s1490 + $0x8] sm:$0xf]
        %v1494 = vld [vmem:[%s1490 + $0xc] sm:$0xf]
        %v1495 = vld [vmem:[%s1490 + $0x10] sm:$0xf]
        %v1496 = vld [vmem:[%s1490 + $0x14] sm:$0xf]
        %v1497 = vld [vmem:[%s1490 + $0x18] sm:$0xf]
        %v1498 = vld [vmem:[%s1490 + $0x1c] sm:$0xf]
        %v1499 = vld [vmem:[%s1490 + $0x20] sm:$0xf]
        %v1500 = vld [vmem:[%s1490 + $0x24] sm:$0xf]
        %v1501 = vld [vmem:[%s1490 + $0x28] sm:$0xf]
        %v1502 = vld [vmem:[%s1490 + $0x2c] sm:$0xf]
        %v1503 = vld [vmem:[%s1490 + $0x30] sm:$0xf]
        %v1504 = vld [vmem:[%s1490 + $0x34] sm:$0xf]
        %v1505 = vld [vmem:[%s1490 + $0x38] sm:$0xf]
        %v1506 = vld [vmem:[%s1490 + $0x3c] sm:$0xf]
        %v1507 = vunpack.c.l.b16 %v1479
        %v1508 = vunpack.c.l.b16 %v1482
        %v1509 = vunpack.c.l.b16 %v1486
        %v1510 = vunpack.c.l.b16 %v1489
        %v1511 = vpack.c.b16 %v1508, %v1507
        %v1512 = vpack.c.b16 %v1510, %v1509
        %v1531 = vunpack.c.l.b16 %v1491
        %v1532 = vunpack.c.l.b16 %v1492
        %v1533 = vunpack.c.l.b16 %v1493
        %v1534 = vunpack.c.l.b16 %v1494
        %v1535 = vunpack.c.l.b16 %v1495
        %v1536 = vunpack.c.l.b16 %v1496
        %v1537 = vunpack.c.l.b16 %v1497
        %v1538 = vunpack.c.l.b16 %v1498
        %v1539 = vunpack.c.l.b16 %v1499
        %v1540 = vunpack.c.l.b16 %v1500
        %v1541 = vunpack.c.l.b16 %v1501
        %v1542 = vunpack.c.l.b16 %v1502
        %v1543 = vunpack.c.l.b16 %v1503
        %v1544 = vunpack.c.l.b16 %v1504
        %v1545 = vunpack.c.l.b16 %v1505
        %v1546 = vunpack.c.l.b16 %v1506
        %v1547 = vpack.c.b16 %v1532, %v1531
        %v1548 = vpack.c.b16 %v1534, %v1533
        %v1549 = vpack.c.b16 %v1536, %v1535
        %v1550 = vpack.c.b16 %v1538, %v1537
        %v1551 = vpack.c.b16 %v1540, %v1539
        %v1552 = vpack.c.b16 %v1542, %v1541
        %v1553 = vpack.c.b16 %v1544, %v1543
        %v1554 = vpack.c.b16 %v1546, %v1545
        %1563 = vmatpush.bf16.msra.mxu0 %v1554
        %1564 = vmatpush.bf16.msra.mxu0 %v1553
        %1565 = vmatpush.bf16.msra.mxu0 %v1552
        %1566 = vmatpush.bf16.msra.mxu0 %v1551
        %1567 = vmatpush.bf16.msra.mxu0 %v1550
        %1568 = vmatpush.bf16.msra.mxu0 %v1549
        %1569 = vmatpush.bf16.msra.mxu0 %v1548
        %1570 = vmatpush.bf16.msra.mxu0 %v1547
        %1571 = vmatmul.bf16.gmra.mxu0 %v1511
        %v1572 = vpop.f32.mrf.mxu0
        %v1573 = vadd.f32 0.0, %v1572
        %v1574 = vpop.f32.mrf.mxu0
        %v1575 = vadd.f32 0.0, %v1574
        %1576 = vmatmul.bf16.gmra.mxu0 %v1512
        %v1577 = vpop.f32.mrf.mxu0
        %v1578 = vadd.f32 0.0, %v1577
        %v1579 = vpop.f32.mrf.mxu0
        %v1580 = vadd.f32 0.0, %v1579
        %1581 = vdwg.mxu0
        %v1582 = vadd.f32 %v1470, %v1573
        %v1583 = vadd.f32 %v1471, %v1575
        %v1584 = vadd.f32 %v1472, %v1578
        %v1585 = vadd.f32 %v1473, %v1580
        %v1586 = vld [vmem:[%s4] sm:$0x1]
        %v1588 = vperm.slane %v1586, 0
        %v1590 = vadd.f32 %v1582, %v1588
        %v1591 = vadd.f32 %v1583, %v1588
        %v1592 = vadd.f32 %v1584, %v1588
        %v1593 = vadd.f32 %v1585, %v1588
        %1594 = vst [vmem:[%s498] sm:$0xff] %v1590
        %1595 = vst [vmem:[%s498 + $0x8] sm:$0xff] %v1591
        %1596 = vst [vmem:[%s498 + $0x10] sm:$0xff] %v1592
        %1597 = vst [vmem:[%s498 + $0x18] sm:$0xff] %v1593
        %v1598 = vadd.f32 %v1590, %v1591
        %v1599 = vadd.f32 %v1598, %v1592
        %v1600 = vadd.f32 %v1599, %v1593
        %v1601 = vrot.slane %v1600, 4
        %v1602 = vadd.f32 %v1600, %v1601
        %v1603 = vrot.slane %v1602, 2
        %v1604 = vadd.f32 %v1602, %v1603
        %v1605 = vrot.slane %v1604, 1
        %v1606 = vadd.f32 %v1604, %v1605
        %1607 = vst [vmem:[%s502] sm:$0x1] %v1606
        %v1608 = vmul.f32 %v1590, %v1590
        %v1609 = vmul.f32 %v1591, %v1591
        %v1610 = vmul.f32 %v1592, %v1592
        %v1611 = vmul.f32 %v1593, %v1593
        %v1612 = vadd.f32 %v1608, %v1609
        %v1613 = vadd.f32 %v1612, %v1610
        %v1614 = vadd.f32 %v1613, %v1611
        %v1615 = vrot.slane %v1614, 4
        %v1616 = vadd.f32 %v1614, %v1615
        %v1617 = vrot.slane %v1616, 2
        %v1618 = vadd.f32 %v1616, %v1617
        %v1619 = vrot.slane %v1618, 1
        %v1620 = vadd.f32 %v1618, %v1619
        %1621 = vst [vmem:[%s502 + $0x1] sm:$0x1] %v1620
        %p1622 = scmp.lt.s32.totalorder %s18, 15
        %s1623 = scalar_select %p1622, %s18, 15
        %s1624 = smul.addr %s1623, 4
        %s1625 = smul.addr %s1624, 8
        %s1626 = scalar_lea.vmem %s5, %s1625
        %p1627 = scmp.lt.s32.totalorder %s18, 15
        %s1628 = scalar_select %p1627, %s18, 15
        %s1629 = smul.addr %s1628, 2
        %s1630 = scalar_lea.vmem %s6, %s1629
        // Predicated region
        $region164: #{encode_conv_forward.2} parent=150 // pred_check
          %p1631 = pneg %p160
        $region165: #{encode_conv_forward.2} parent=150 // pred_check_branch
          %1633 = sbr.rel (%p1631) target = $region167
        $region166: #{encode_conv_forward.2} parent=150 // pred_region
          _
        $region167: #{encode_conv_forward.2} parent=150 // pred_fallthru
          _
        // Predicated region
        $region168: #{encode_conv_forward.2} parent=150 // pred_check
          %p1634 = pneg %p186
        $region169: #{encode_conv_forward.2} parent=150 // pred_check_branch
          %1636 = sbr.rel (%p1634) target = $region171
        $region170: #{encode_conv_forward.2} parent=150 // pred_region
          _
        $region171: #{encode_conv_forward.2} parent=150 // pred_fallthru
          _
      $region151: #{encode_conv_forward.2} parent=5 // pred_fallthru
        _
      %p1637 = scmp.le.s32.totalorder 2, %s13
      // Predicated region
      $region172: #{encode_conv_forward.2} parent=5 // pred_check
        %p1638 = pneg %p1637
      $region173: #{encode_conv_forward.2} parent=5 // pred_check_branch
        %1640 = sbr.rel (%p1638) target = $region175
      $region174: #{encode_conv_forward.2} parent=5 // pred_region
        %s1641 = ssub.s32 %s13, 2
        // Predicated region
        $region176: #{encode_conv_forward.2} parent=174 // pred_check
          %p1642 = pneg %p166
        $region177: #{encode_conv_forward.2} parent=174 // pred_check_branch
          %1644 = sbr.rel (%p1642) target = $region179
        $region178: #{encode_conv_forward.2} parent=174 // pred_region
          %p1645 = scmp.lt.s32.totalorder %s19, 15
          %s1646 = scalar_select %p1645, %s19, 15
          %s1647 = smul.addr %s1646, 4
          %s1648 = smul.addr %s1647, 8
          %s1649 = scalar_lea.vmem %s5, %s1648
        $region179: #{encode_conv_forward.2} parent=174 // pred_fallthru
          _
        // Predicated region
        $region180: #{encode_conv_forward.2} parent=174 // pred_check
          %p1650 = pneg %p192
        $region181: #{encode_conv_forward.2} parent=174 // pred_check_branch
          %1652 = sbr.rel (%p1650) target = $region183
        $region182: #{encode_conv_forward.2} parent=174 // pred_region
          %p1653 = scmp.lt.s32.totalorder %s19, 15
          %s1654 = scalar_select %p1653, %s19, 15
          %s1655 = smul.addr %s1654, 2
          %s1656 = scalar_lea.vmem %s6, %s1655
        $region183: #{encode_conv_forward.2} parent=174 // pred_fallthru
          _
      $region175: #{encode_conv_forward.2} parent=5 // pred_fallthru
        _
    $region6: #{encode_conv_forward.2} parent=1 // loop_footer
      %s17 = sadd.s32 1, %s13
    $region7: #{encode_conv_forward.2} parent=1 // loop_footer_branch
      %12 = sbr.rel target = $region3
    $region8: #{encode_conv_forward.2} parent=1 // loop_exit
      _

</llo_original>
